<compile_context>
chip_gen: v6e
topology: v6e:2x2x1
jax: 0.10.0
libtpu: 0.0.40
codegen_flags: <defaults>
</compile_context>

<pallas_src>
import jax
import jax.numpy as jnp
from jax import lax
from jax.experimental import pallas as pl
from jax.experimental.pallas import tpu as pltpu

HIDDEN = 32      # args['hidden_units'] (small for test)
MAXLEN = 8       # args['maxlen']       (small for test)
NUM_BLOCKS = 2   # args['num_blocks']
NUM_GCN = 1      # args['num_gcn_layers']
ITEM_NUM = 63    # item table has ITEM_NUM+1 rows (row 0 is padding)
BATCH = 2
EPS = 1e-8       # LayerNorm eps used by the PyTorch module
NEG_INF = -1e9   # additive mask value


def _layernorm(x, g, b):
    mu = jnp.mean(x, axis=-1, keepdims=True)
    var = jnp.mean((x - mu) ** 2, axis=-1, keepdims=True)
    return (x - mu) * lax.rsqrt(var + EPS) * g + b


# --------------------------- the single fused kernel ---------------------------
def sasrec_fused_kernel(adj_ref, item_emb_ref, w_ref, vec_ref, idx_ref, addmask_ref, out_ref):
    BL = out_ref.shape[0] // 2
    N1, H = item_emb_ref.shape
    G = NUM_GCN

    vecs = vec_ref[...]           # (R, H) small vector slab, one load

    # vec-slab static row layout (see _pack_params):
    #   [0, BL)                         positional embedding slab (positions 1..L, tiled over B)
    #   [BL, BL+G)                      GCN biases
    #   per block b: base = BL+G+10*b   [ln_ag, ln_ab, b_q, b_k, b_v, b_o, ln_fg, ln_fb, b_f1, b_f2]
    #   last two rows                   final LayerNorm gamma, beta
    GCN_B = BL
    BLK0 = BL + G
    LAST = BLK0 + 10 * NUM_BLOCKS

    def vrow(r):                  # (1, H) broadcast row, static slice
        return vecs[r:r + 1, :]

    # weight-slab static layout: [0, G) GCN weights; per block: wq, wk, wv, wo, w_ffn1, w_ffn2
    def wmat(i):
        return w_ref[i]

    # ---- GCN over the item table (GCNLayer: relu(linear(adj @ x))) ----
    items = item_emb_ref[...]                     # raw table, used for pos/neg logits
    x_items = items
    for g in range(G):                            # static unroll (NUM_GCN is small)
        agg = jnp.dot(adj_ref[...], x_items, preferred_element_type=jnp.float32)
        x_items = jnp.maximum(
            jnp.dot(agg, wmat(g), preferred_element_type=jnp.float32) + vrow(GCN_B + g),
            0.0)
    # sqrt(H) embedding scale is folded into the last GCN layer's W/b host-side.

    # ---- embedding lookups: one fused one-hot; rows [0,BL)=log, [BL,2BL)=pos, [2BL,3BL)=neg ----
    col = lax.broadcasted_iota(jnp.int32, (3 * BL, N1), 1)
    oh = (idx_ref[...] == col).astype(jnp.float32)                               # (3BL, N1)
    seqs = jnp.dot(oh[0:BL], x_items, preferred_element_type=jnp.float32)        # (BL, H)
    pn_embs = jnp.dot(oh[BL:3 * BL], items, preferred_element_type=jnp.float32)  # (2BL, H)

    nonpad = (idx_ref[0:BL] != 0).astype(jnp.float32)                            # (BL, 1)
    x = (seqs + vecs[0:BL, :]) * nonpad           # seqs *= ~timeline_mask (after embedding)

    addmask = addmask_ref[...]    # (BL, BL): 0 where causal & same sequence, -1e9 elsewhere

    # ---- transformer blocks, fully unrolled; activations stay flat (BL, H) in vregs ----
    for blk in range(NUM_BLOCKS):
        wb = G + 6 * blk
        rb = BLK0 + 10 * blk

        q_in = _layernorm(x, vrow(rb + 0), vrow(rb + 1))          # attention LN (queries only)
        # pre-transposed weights; 1/sqrt(H) folded into W_q / b_q host-side
        q = jnp.dot(q_in, wmat(wb + 0), preferred_element_type=jnp.float32) + vrow(rb + 2)
        k = jnp.dot(x,    wmat(wb + 1), preferred_element_type=jnp.float32) + vrow(rb + 3)
        v = jnp.dot(x,    wmat(wb + 2), preferred_element_type=jnp.float32) + vrow(rb + 4)

        # block-diagonal attention over the flat (BL, H) slab
        scores = lax.dot_general(q, k, (((1,), (1,)), ((), ())),
                                 preferred_element_type=jnp.float32) + addmask   # (BL, BL)
        m = jnp.max(scores, axis=-1, keepdims=True)
        e = jnp.exp(scores - m)
        p = e * pl.reciprocal(jnp.sum(e, axis=-1, keepdims=True), approx=False)
        attn = jnp.dot(p, v, preferred_element_type=jnp.float32)                 # (BL, H)

        mha = jnp.dot(attn, wmat(wb + 3), preferred_element_type=jnp.float32) + vrow(rb + 5)
        s = _layernorm(q_in + mha, vrow(rb + 6), vrow(rb + 7))    # forward LN of (Q + mha)

        # PointWiseFeedForward: Conv1d(k=1) -> ReLU -> Conv1d(k=1) + residual
        h1 = jnp.maximum(
            jnp.dot(s, wmat(wb + 4), preferred_element_type=jnp.float32) + vrow(rb + 8), 0.0)
        h2 = jnp.dot(h1, wmat(wb + 5), preferred_element_type=jnp.float32) + vrow(rb + 9)
        x = (h2 + s) * nonpad                     # seqs *= ~timeline_mask (after each block)

    # ---- final LayerNorm + BPR-style logits against the raw item table ----
    lf = _layernorm(x, vrow(LAST + 0), vrow(LAST + 1))            # (BL, H)
    lf2 = jnp.concatenate([lf, lf], axis=0)                       # (2BL, H)
    out_ref[...] = jnp.sum(lf2 * pn_embs, axis=-1, keepdims=True)  # rows [0,BL)=pos, [BL,2BL)=neg


# --------------------------- host-side parameter packing ---------------------------
def _pack_params(params, B, L):
    H = HIDDEN
    G = len(params["gcn"])
    scale_q = 1.0 / (H ** 0.5)
    sqrt_h = float(H) ** 0.5

    w_list, vec_rows = [], []

    # positional embedding slab: positions 1..L, tiled over batch (padding masked in-kernel)
    vec_rows.append(jnp.tile(params["pos_emb"][1:L + 1], (B, 1)))          # rows [0, B*L)

    gcn_bias_rows = []
    for i, (w, b) in enumerate(params["gcn"]):
        wt, bb = w.T, b.reshape(1, H)
        if i == G - 1:             # fold sqrt(H) embedding scale (ReLU is positively homogeneous)
            wt, bb = wt * sqrt_h, bb * sqrt_h
        w_list.append(wt)
        gcn_bias_rows.append(bb)
    vec_rows.extend(gcn_bias_rows)

    for (g1, be1, wqkv, bqkv, wo, bo, g2, be2, w1, b1, w2, b2) in params["blocks"]:
        wq, wk, wv = wqkv[:H], wqkv[H:2 * H], wqkv[2 * H:]
        bq, bk, bv = bqkv[:, :H], bqkv[:, H:2 * H], bqkv[:, 2 * H:]
        w_list.extend([wq.T * scale_q, wk.T, wv.T, wo.T, w1.T, w2.T])      # pre-transposed
        vec_rows.extend([g1, be1, bq * scale_q, bk, bv, bo, g2, be2, b1, b2])

    vec_rows.extend([params["last_ln_g"], params["last_ln_b"]])
    return jnp.stack(w_list), jnp.concatenate(vec_rows, axis=0)            # (G+6NB,H,H), (R,H)


# ------------------------------ full forward ------------------------------
@jax.jit
def sasrec_forward(params, log_seqs, pos_seqs, neg_seqs):
    B, L = log_seqs.shape
    BL = B * L

    w_slab, vec_slab = _pack_params(params, B, L)

    # one packed index operand: rows [0,BL)=log, [BL,2BL)=pos, [2BL,3BL)=neg
    idx = jnp.concatenate(
        [log_seqs.reshape(BL, 1), pos_seqs.reshape(BL, 1), neg_seqs.reshape(BL, 1)],
        axis=0).astype(jnp.int32)                                           # (3BL, 1)

    # block-diagonal causal additive mask over the flattened (B*L) axis
    bid = jnp.repeat(jnp.arange(B), L)
    pid = jnp.tile(jnp.arange(L), B)
    allowed = (bid[:, None] == bid[None, :]) & (pid[:, None] >= pid[None, :])
    addmask = jnp.where(allowed, 0.0, NEG_INF).astype(jnp.float32)          # (BL, BL)

    out = pl.pallas_call(
        sasrec_fused_kernel,
        out_shape=jax.ShapeDtypeStruct((2 * BL, 1), jnp.float32),
        compiler_params=pltpu.CompilerParams(vmem_limit_bytes=32 * 1024 * 1024),
    )(params["adj"], params["item_emb"], w_slab, vec_slab, idx, addmask)

    out = out.reshape(2, B, L)
    return out[0], out[1]


# --------------------------- deterministic init ---------------------------
def init_params(key):
    ks = iter(jax.random.split(key, 64))

    def nrm(shape, scale=0.02):
        return scale * jax.random.normal(next(ks), shape, jnp.float32)

    H = HIDDEN
    item_emb = nrm((ITEM_NUM + 1, H)).at[0].set(0.0)   # padding_idx=0
    pos_emb = nrm((MAXLEN + 1, H)).at[0].set(0.0)      # padding_idx=0

    adj = jnp.abs(nrm((ITEM_NUM + 1, ITEM_NUM + 1), 1.0))
    adj = adj / jnp.sum(adj, axis=1, keepdims=True)    # synthetic row-normalized adjacency

    gcn = [(nrm((H, H)), nrm((H,))) for _ in range(NUM_GCN)]

    blocks = []
    for _ in range(NUM_BLOCKS):
        blocks.append((
            jnp.ones((1, H), jnp.float32), jnp.zeros((1, H), jnp.float32),  # attn LN
            nrm((3 * H, H)), nrm((1, 3 * H)),                               # MHA in_proj
            nrm((H, H)), nrm((1, H)),                                       # MHA out_proj
            jnp.ones((1, H), jnp.float32), jnp.zeros((1, H), jnp.float32),  # fwd LN
            nrm((H, H)), nrm((1, H)),                                       # conv1 (k=1)
            nrm((H, H)), nrm((1, H)),                                       # conv2 (k=1)
        ))

    return dict(item_emb=item_emb, pos_emb=pos_emb, adj=adj, gcn=gcn, blocks=blocks,
                last_ln_g=jnp.ones((1, H), jnp.float32),
                last_ln_b=jnp.zeros((1, H), jnp.float32))


if __name__ == "__main__":
    params = init_params(jax.random.PRNGKey(0))
    k1, k2, k3 = jax.random.split(jax.random.PRNGKey(0), 3)
    log_seqs = jax.random.randint(k1, (BATCH, MAXLEN), 0, ITEM_NUM + 1, dtype=jnp.int32)
    pos_seqs = jax.random.randint(k2, (BATCH, MAXLEN), 1, ITEM_NUM + 1, dtype=jnp.int32)
    neg_seqs = jax.random.randint(k3, (BATCH, MAXLEN), 1, ITEM_NUM + 1, dtype=jnp.int32)

    pos_logits, neg_logits = sasrec_forward(params, log_seqs, pos_seqs, neg_seqs)
    jax.block_until_ready((pos_logits, neg_logits))
    assert pos_logits.shape == (BATCH, MAXLEN) and neg_logits.shape == (BATCH, MAXLEN)
    assert bool(jnp.all(jnp.isfinite(pos_logits))) and bool(jnp.all(jnp.isfinite(neg_logits)))
    print("KERNEL_OK")
</pallas_src>

<mosaic_0001>
module attributes {stable_mosaic.version = 11 : i64} {
  func.func @sasrec_fused_kernel(%arg0: memref<64x64xf32, #tpu.memory_space<vmem>>, %arg1: memref<64x32xf32, #tpu.memory_space<vmem>>, %arg2: memref<13x32x32xf32, #tpu.memory_space<vmem>>, %arg3: memref<39x32xf32, #tpu.memory_space<vmem>>, %arg4: memref<48x1xi32, #tpu.memory_space<vmem>>, %arg5: memref<16x16xf32, #tpu.memory_space<vmem>>, %arg6: memref<32x1xf32, #tpu.memory_space<vmem>>) attributes {dimension_semantics = [], scalar_prefetch = 0 : i64, scratch_operands = 0 : i64, tpu.core_type = #tpu.core_type<tc>} {
    %c0 = arith.constant 0 : index
    %c0_0 = arith.constant 0 : index
    %0 = vector.load %arg3[%c0, %c0_0] : memref<39x32xf32, #tpu.memory_space<vmem>>, vector<39x32xf32>
    %c0_1 = arith.constant 0 : index
    %c0_2 = arith.constant 0 : index
    %1 = vector.load %arg1[%c0_1, %c0_2] : memref<64x32xf32, #tpu.memory_space<vmem>>, vector<64x32xf32>
    %c0_3 = arith.constant 0 : index
    %c0_4 = arith.constant 0 : index
    %2 = vector.load %arg0[%c0_3, %c0_4] : memref<64x64xf32, #tpu.memory_space<vmem>>, vector<64x64xf32>
    %cst = arith.constant dense<0.000000e+00> : vector<64x32xf32>
    %3 = tpu.matmul %2, %1, %cst {dimension_numbers = #tpu.dot_dimension_numbers<[1], [0], [0], [1], [0, 0, 1, 1], [], []>} : vector<64x64xf32>, vector<64x32xf32>, vector<64x32xf32> -> vector<64x32xf32>
    %c0_5 = arith.constant 0 : index
    %c0_6 = arith.constant 0 : index
    %c0_7 = arith.constant 0 : index
    %4 = vector.load %arg2[%c0_5, %c0_6, %c0_7] : memref<13x32x32xf32, #tpu.memory_space<vmem>>, vector<1x32x32xf32>
    %5 = vector.shape_cast %4 : vector<1x32x32xf32> to vector<32x32xf32>
    %cst_8 = arith.constant dense<0.000000e+00> : vector<64x32xf32>
    %6 = tpu.matmul %3, %5, %cst_8 {dimension_numbers = #tpu.dot_dimension_numbers<[1], [0], [0], [1], [0, 0, 1, 1], [], []>} : vector<64x32xf32>, vector<32x32xf32>, vector<64x32xf32> -> vector<64x32xf32>
    %7 = vector.extract_strided_slice %0 {offsets = [16, 0], sizes = [1, 32], strides = [1, 1]} : vector<39x32xf32> to vector<1x32xf32>
    %8 = vector.broadcast %7 : vector<1x32xf32> to vector<64x32xf32>
    %9 = arith.addf %6, %8 : vector<64x32xf32>
    %cst_9 = arith.constant 0.000000e+00 : f32
    %10 = vector.broadcast %cst_9 : f32 to vector<64x32xf32>
    %11 = arith.maximumf %9, %10 : vector<64x32xf32>
    %12 = tpu.iota {dimensions = array<i32: 1>} : vector<48x64xi32>
    %c0_10 = arith.constant 0 : index
    %c0_11 = arith.constant 0 : index
    %13 = vector.load %arg4[%c0_10, %c0_11] : memref<48x1xi32, #tpu.memory_space<vmem>>, vector<48x1xi32>
    %14 = vector.broadcast %13 : vector<48x1xi32> to vector<48x64xi32>
    %15 = arith.cmpi eq, %14, %12 : vector<48x64xi32>
    %16 = arith.extui %15 : vector<48x64xi1> to vector<48x64xi32>
    %17 = arith.sitofp %16 : vector<48x64xi32> to vector<48x64xf32>
    %18 = vector.extract_strided_slice %17 {offsets = [0, 0], sizes = [16, 64], strides = [1, 1]} : vector<48x64xf32> to vector<16x64xf32>
    %cst_12 = arith.constant dense<0.000000e+00> : vector<16x32xf32>
    %19 = tpu.matmul %18, %11, %cst_12 {dimension_numbers = #tpu.dot_dimension_numbers<[1], [0], [0], [1], [0, 0, 1, 1], [], []>} : vector<16x64xf32>, vector<64x32xf32>, vector<16x32xf32> -> vector<16x32xf32>
    %20 = vector.extract_strided_slice %17 {offsets = [16, 0], sizes = [32, 64], strides = [1, 1]} : vector<48x64xf32> to vector<32x64xf32>
    %cst_13 = arith.constant dense<0.000000e+00> : vector<32x32xf32>
    %21 = tpu.matmul %20, %1, %cst_13 {dimension_numbers = #tpu.dot_dimension_numbers<[1], [0], [0], [1], [0, 0, 1, 1], [], []>} : vector<32x64xf32>, vector<64x32xf32>, vector<32x32xf32> -> vector<32x32xf32>
    %c0_14 = arith.constant 0 : index
    %c0_15 = arith.constant 0 : index
    %22 = vector.load %arg4[%c0_14, %c0_15] : memref<48x1xi32, #tpu.memory_space<vmem>>, vector<16x1xi32>
    %c0_i32 = arith.constant 0 : i32
    %23 = vector.broadcast %c0_i32 : i32 to vector<16x1xi32>
    %24 = arith.cmpi ne, %22, %23 : vector<16x1xi32>
    %25 = arith.extui %24 : vector<16x1xi1> to vector<16x1xi32>
    %26 = arith.sitofp %25 : vector<16x1xi32> to vector<16x1xf32>
    %27 = vector.extract_strided_slice %0 {offsets = [0, 0], sizes = [16, 32], strides = [1, 1]} : vector<39x32xf32> to vector<16x32xf32>
    %28 = arith.addf %19, %27 : vector<16x32xf32>
    %29 = vector.broadcast %26 : vector<16x1xf32> to vector<16x32xf32>
    %30 = arith.mulf %28, %29 : vector<16x32xf32>
    %c0_16 = arith.constant 0 : index
    %c0_17 = arith.constant 0 : index
    %31 = vector.load %arg5[%c0_16, %c0_17] : memref<16x16xf32, #tpu.memory_space<vmem>>, vector<16x16xf32>
    %32 = vector.extract_strided_slice %0 {offsets = [17, 0], sizes = [1, 32], strides = [1, 1]} : vector<39x32xf32> to vector<1x32xf32>
    %33 = vector.extract_strided_slice %0 {offsets = [18, 0], sizes = [1, 32], strides = [1, 1]} : vector<39x32xf32> to vector<1x32xf32>
    %cst_18 = arith.constant dense<0.000000e+00> : vector<16xf32>
    %34 = vector.multi_reduction <add>, %30, %cst_18 [1] : vector<16x32xf32> to vector<16xf32>
    %35 = vector.shape_cast %34 : vector<16xf32> to vector<16x1xf32>
    %cst_19 = arith.constant 3.200000e+01 : f32
    %36 = vector.broadcast %cst_19 : f32 to vector<16x1xf32>
    %37 = arith.divf %35, %36 : vector<16x1xf32>
    %38 = vector.broadcast %37 : vector<16x1xf32> to vector<16x32xf32>
    %39 = arith.subf %30, %38 : vector<16x32xf32>
    %40 = arith.mulf %39, %39 : vector<16x32xf32>
    %cst_20 = arith.constant dense<0.000000e+00> : vector<16xf32>
    %41 = vector.multi_reduction <add>, %40, %cst_20 [1] : vector<16x32xf32> to vector<16xf32>
    %42 = vector.shape_cast %41 : vector<16xf32> to vector<16x1xf32>
    %cst_21 = arith.constant 3.200000e+01 : f32
    %43 = vector.broadcast %cst_21 : f32 to vector<16x1xf32>
    %44 = arith.divf %42, %43 : vector<16x1xf32>
    %45 = vector.broadcast %37 : vector<16x1xf32> to vector<16x32xf32>
    %46 = arith.subf %30, %45 : vector<16x32xf32>
    %cst_22 = arith.constant 9.99999993E-9 : f32
    %47 = vector.broadcast %cst_22 : f32 to vector<16x1xf32>
    %48 = arith.addf %44, %47 : vector<16x1xf32>
    %49 = math.rsqrt %48 : vector<16x1xf32>
    %50 = vector.broadcast %49 : vector<16x1xf32> to vector<16x32xf32>
    %51 = arith.mulf %46, %50 : vector<16x32xf32>
    %52 = vector.broadcast %32 : vector<1x32xf32> to vector<16x32xf32>
    %53 = arith.mulf %51, %52 : vector<16x32xf32>
    %54 = vector.broadcast %33 : vector<1x32xf32> to vector<16x32xf32>
    %55 = arith.addf %53, %54 : vector<16x32xf32>
    %c1 = arith.constant 1 : index
    %c0_23 = arith.constant 0 : index
    %c0_24 = arith.constant 0 : index
    %56 = vector.load %arg2[%c1, %c0_23, %c0_24] : memref<13x32x32xf32, #tpu.memory_space<vmem>>, vector<1x32x32xf32>
    %57 = vector.shape_cast %56 : vector<1x32x32xf32> to vector<32x32xf32>
    %cst_25 = arith.constant dense<0.000000e+00> : vector<16x32xf32>
    %58 = tpu.matmul %55, %57, %cst_25 {dimension_numbers = #tpu.dot_dimension_numbers<[1], [0], [0], [1], [0, 0, 1, 1], [], []>} : vector<16x32xf32>, vector<32x32xf32>, vector<16x32xf32> -> vector<16x32xf32>
    %59 = vector.extract_strided_slice %0 {offsets = [19, 0], sizes = [1, 32], strides = [1, 1]} : vector<39x32xf32> to vector<1x32xf32>
    %60 = vector.broadcast %59 : vector<1x32xf32> to vector<16x32xf32>
    %61 = arith.addf %58, %60 : vector<16x32xf32>
    %c2 = arith.constant 2 : index
    %c0_26 = arith.constant 0 : index
    %c0_27 = arith.constant 0 : index
    %62 = vector.load %arg2[%c2, %c0_26, %c0_27] : memref<13x32x32xf32, #tpu.memory_space<vmem>>, vector<1x32x32xf32>
    %63 = vector.shape_cast %62 : vector<1x32x32xf32> to vector<32x32xf32>
    %cst_28 = arith.constant dense<0.000000e+00> : vector<16x32xf32>
    %64 = tpu.matmul %30, %63, %cst_28 {dimension_numbers = #tpu.dot_dimension_numbers<[1], [0], [0], [1], [0, 0, 1, 1], [], []>} : vector<16x32xf32>, vector<32x32xf32>, vector<16x32xf32> -> vector<16x32xf32>
    %65 = vector.extract_strided_slice %0 {offsets = [20, 0], sizes = [1, 32], strides = [1, 1]} : vector<39x32xf32> to vector<1x32xf32>
    %66 = vector.broadcast %65 : vector<1x32xf32> to vector<16x32xf32>
    %67 = arith.addf %64, %66 : vector<16x32xf32>
    %c3 = arith.constant 3 : index
    %c0_29 = arith.constant 0 : index
    %c0_30 = arith.constant 0 : index
    %68 = vector.load %arg2[%c3, %c0_29, %c0_30] : memref<13x32x32xf32, #tpu.memory_space<vmem>>, vector<1x32x32xf32>
    %69 = vector.shape_cast %68 : vector<1x32x32xf32> to vector<32x32xf32>
    %cst_31 = arith.constant dense<0.000000e+00> : vector<16x32xf32>
    %70 = tpu.matmul %30, %69, %cst_31 {dimension_numbers = #tpu.dot_dimension_numbers<[1], [0], [0], [1], [0, 0, 1, 1], [], []>} : vector<16x32xf32>, vector<32x32xf32>, vector<16x32xf32> -> vector<16x32xf32>
    %71 = vector.extract_strided_slice %0 {offsets = [21, 0], sizes = [1, 32], strides = [1, 1]} : vector<39x32xf32> to vector<1x32xf32>
    %72 = vector.broadcast %71 : vector<1x32xf32> to vector<16x32xf32>
    %73 = arith.addf %70, %72 : vector<16x32xf32>
    %cst_32 = arith.constant dense<0.000000e+00> : vector<16x16xf32>
    %74 = tpu.matmul %61, %67, %cst_32 {dimension_numbers = #tpu.dot_dimension_numbers<[1], [1], [0], [0], [0, 0, 1, 0], [], []>} : vector<16x32xf32>, vector<16x32xf32>, vector<16x16xf32> -> vector<16x16xf32>
    %75 = arith.addf %74, %31 : vector<16x16xf32>
    %cst_33 = arith.constant dense<0xFF800000> : vector<16xf32>
    %76 = vector.multi_reduction <maximumf>, %75, %cst_33 [1] : vector<16x16xf32> to vector<16xf32>
    %77 = vector.shape_cast %76 : vector<16xf32> to vector<16x1xf32>
    %78 = vector.broadcast %77 : vector<16x1xf32> to vector<16x16xf32>
    %79 = arith.subf %75, %78 : vector<16x16xf32>
    %80 = math.exp %79 : vector<16x16xf32>
    %cst_34 = arith.constant dense<0.000000e+00> : vector<16xf32>
    %81 = vector.multi_reduction <add>, %80, %cst_34 [1] : vector<16x16xf32> to vector<16xf32>
    %82 = vector.shape_cast %81 : vector<16xf32> to vector<16x1xf32>
    %83 = tpu.reciprocal %82 : vector<16x1xf32> -> vector<16x1xf32>
    %84 = vector.broadcast %83 : vector<16x1xf32> to vector<16x16xf32>
    %85 = arith.mulf %80, %84 : vector<16x16xf32>
    %cst_35 = arith.constant dense<0.000000e+00> : vector<16x32xf32>
    %86 = tpu.matmul %85, %73, %cst_35 {dimension_numbers = #tpu.dot_dimension_numbers<[1], [0], [0], [1], [0, 0, 1, 1], [], []>} : vector<16x16xf32>, vector<16x32xf32>, vector<16x32xf32> -> vector<16x32xf32>
    %c4 = arith.constant 4 : index
    %c0_36 = arith.constant 0 : index
    %c0_37 = arith.constant 0 : index
    %87 = vector.load %arg2[%c4, %c0_36, %c0_37] : memref<13x32x32xf32, #tpu.memory_space<vmem>>, vector<1x32x32xf32>
    %88 = vector.shape_cast %87 : vector<1x32x32xf32> to vector<32x32xf32>
    %cst_38 = arith.constant dense<0.000000e+00> : vector<16x32xf32>
    %89 = tpu.matmul %86, %88, %cst_38 {dimension_numbers = #tpu.dot_dimension_numbers<[1], [0], [0], [1], [0, 0, 1, 1], [], []>} : vector<16x32xf32>, vector<32x32xf32>, vector<16x32xf32> -> vector<16x32xf32>
    %90 = vector.extract_strided_slice %0 {offsets = [22, 0], sizes = [1, 32], strides = [1, 1]} : vector<39x32xf32> to vector<1x32xf32>
    %91 = vector.broadcast %90 : vector<1x32xf32> to vector<16x32xf32>
    %92 = arith.addf %89, %91 : vector<16x32xf32>
    %93 = arith.addf %55, %92 : vector<16x32xf32>
    %94 = vector.extract_strided_slice %0 {offsets = [23, 0], sizes = [1, 32], strides = [1, 1]} : vector<39x32xf32> to vector<1x32xf32>
    %95 = vector.extract_strided_slice %0 {offsets = [24, 0], sizes = [1, 32], strides = [1, 1]} : vector<39x32xf32> to vector<1x32xf32>
    %cst_39 = arith.constant dense<0.000000e+00> : vector<16xf32>
    %96 = vector.multi_reduction <add>, %93, %cst_39 [1] : vector<16x32xf32> to vector<16xf32>
    %97 = vector.shape_cast %96 : vector<16xf32> to vector<16x1xf32>
    %cst_40 = arith.constant 3.200000e+01 : f32
    %98 = vector.broadcast %cst_40 : f32 to vector<16x1xf32>
    %99 = arith.divf %97, %98 : vector<16x1xf32>
    %100 = vector.broadcast %99 : vector<16x1xf32> to vector<16x32xf32>
    %101 = arith.subf %93, %100 : vector<16x32xf32>
    %102 = arith.mulf %101, %101 : vector<16x32xf32>
    %cst_41 = arith.constant dense<0.000000e+00> : vector<16xf32>
    %103 = vector.multi_reduction <add>, %102, %cst_41 [1] : vector<16x32xf32> to vector<16xf32>
    %104 = vector.shape_cast %103 : vector<16xf32> to vector<16x1xf32>
    %cst_42 = arith.constant 3.200000e+01 : f32
    %105 = vector.broadcast %cst_42 : f32 to vector<16x1xf32>
    %106 = arith.divf %104, %105 : vector<16x1xf32>
    %107 = vector.broadcast %99 : vector<16x1xf32> to vector<16x32xf32>
    %108 = arith.subf %93, %107 : vector<16x32xf32>
    %cst_43 = arith.constant 9.99999993E-9 : f32
    %109 = vector.broadcast %cst_43 : f32 to vector<16x1xf32>
    %110 = arith.addf %106, %109 : vector<16x1xf32>
    %111 = math.rsqrt %110 : vector<16x1xf32>
    %112 = vector.broadcast %111 : vector<16x1xf32> to vector<16x32xf32>
    %113 = arith.mulf %108, %112 : vector<16x32xf32>
    %114 = vector.broadcast %94 : vector<1x32xf32> to vector<16x32xf32>
    %115 = arith.mulf %113, %114 : vector<16x32xf32>
    %116 = vector.broadcast %95 : vector<1x32xf32> to vector<16x32xf32>
    %117 = arith.addf %115, %116 : vector<16x32xf32>
    %c5 = arith.constant 5 : index
    %c0_44 = arith.constant 0 : index
    %c0_45 = arith.constant 0 : index
    %118 = vector.load %arg2[%c5, %c0_44, %c0_45] : memref<13x32x32xf32, #tpu.memory_space<vmem>>, vector<1x32x32xf32>
    %119 = vector.shape_cast %118 : vector<1x32x32xf32> to vector<32x32xf32>
    %cst_46 = arith.constant dense<0.000000e+00> : vector<16x32xf32>
    %120 = tpu.matmul %117, %119, %cst_46 {dimension_numbers = #tpu.dot_dimension_numbers<[1], [0], [0], [1], [0, 0, 1, 1], [], []>} : vector<16x32xf32>, vector<32x32xf32>, vector<16x32xf32> -> vector<16x32xf32>
    %121 = vector.extract_strided_slice %0 {offsets = [25, 0], sizes = [1, 32], strides = [1, 1]} : vector<39x32xf32> to vector<1x32xf32>
    %122 = vector.broadcast %121 : vector<1x32xf32> to vector<16x32xf32>
    %123 = arith.addf %120, %122 : vector<16x32xf32>
    %cst_47 = arith.constant 0.000000e+00 : f32
    %124 = vector.broadcast %cst_47 : f32 to vector<16x32xf32>
    %125 = arith.maximumf %123, %124 : vector<16x32xf32>
    %c6 = arith.constant 6 : index
    %c0_48 = arith.constant 0 : index
    %c0_49 = arith.constant 0 : index
    %126 = vector.load %arg2[%c6, %c0_48, %c0_49] : memref<13x32x32xf32, #tpu.memory_space<vmem>>, vector<1x32x32xf32>
    %127 = vector.shape_cast %126 : vector<1x32x32xf32> to vector<32x32xf32>
    %cst_50 = arith.constant dense<0.000000e+00> : vector<16x32xf32>
    %128 = tpu.matmul %125, %127, %cst_50 {dimension_numbers = #tpu.dot_dimension_numbers<[1], [0], [0], [1], [0, 0, 1, 1], [], []>} : vector<16x32xf32>, vector<32x32xf32>, vector<16x32xf32> -> vector<16x32xf32>
    %129 = vector.extract_strided_slice %0 {offsets = [26, 0], sizes = [1, 32], strides = [1, 1]} : vector<39x32xf32> to vector<1x32xf32>
    %130 = vector.broadcast %129 : vector<1x32xf32> to vector<16x32xf32>
    %131 = arith.addf %128, %130 : vector<16x32xf32>
    %132 = arith.addf %131, %117 : vector<16x32xf32>
    %133 = vector.broadcast %26 : vector<16x1xf32> to vector<16x32xf32>
    %134 = arith.mulf %132, %133 : vector<16x32xf32>
    %135 = vector.extract_strided_slice %0 {offsets = [27, 0], sizes = [1, 32], strides = [1, 1]} : vector<39x32xf32> to vector<1x32xf32>
    %136 = vector.extract_strided_slice %0 {offsets = [28, 0], sizes = [1, 32], strides = [1, 1]} : vector<39x32xf32> to vector<1x32xf32>
    %cst_51 = arith.constant dense<0.000000e+00> : vector<16xf32>
    %137 = vector.multi_reduction <add>, %134, %cst_51 [1] : vector<16x32xf32> to vector<16xf32>
    %138 = vector.shape_cast %137 : vector<16xf32> to vector<16x1xf32>
    %cst_52 = arith.constant 3.200000e+01 : f32
    %139 = vector.broadcast %cst_52 : f32 to vector<16x1xf32>
    %140 = arith.divf %138, %139 : vector<16x1xf32>
    %141 = vector.broadcast %140 : vector<16x1xf32> to vector<16x32xf32>
    %142 = arith.subf %134, %141 : vector<16x32xf32>
    %143 = arith.mulf %142, %142 : vector<16x32xf32>
    %cst_53 = arith.constant dense<0.000000e+00> : vector<16xf32>
    %144 = vector.multi_reduction <add>, %143, %cst_53 [1] : vector<16x32xf32> to vector<16xf32>
    %145 = vector.shape_cast %144 : vector<16xf32> to vector<16x1xf32>
    %cst_54 = arith.constant 3.200000e+01 : f32
    %146 = vector.broadcast %cst_54 : f32 to vector<16x1xf32>
    %147 = arith.divf %145, %146 : vector<16x1xf32>
    %148 = vector.broadcast %140 : vector<16x1xf32> to vector<16x32xf32>
    %149 = arith.subf %134, %148 : vector<16x32xf32>
    %cst_55 = arith.constant 9.99999993E-9 : f32
    %150 = vector.broadcast %cst_55 : f32 to vector<16x1xf32>
    %151 = arith.addf %147, %150 : vector<16x1xf32>
    %152 = math.rsqrt %151 : vector<16x1xf32>
    %153 = vector.broadcast %152 : vector<16x1xf32> to vector<16x32xf32>
    %154 = arith.mulf %149, %153 : vector<16x32xf32>
    %155 = vector.broadcast %135 : vector<1x32xf32> to vector<16x32xf32>
    %156 = arith.mulf %154, %155 : vector<16x32xf32>
    %157 = vector.broadcast %136 : vector<1x32xf32> to vector<16x32xf32>
    %158 = arith.addf %156, %157 : vector<16x32xf32>
    %c7 = arith.constant 7 : index
    %c0_56 = arith.constant 0 : index
    %c0_57 = arith.constant 0 : index
    %159 = vector.load %arg2[%c7, %c0_56, %c0_57] : memref<13x32x32xf32, #tpu.memory_space<vmem>>, vector<1x32x32xf32>
    %160 = vector.shape_cast %159 : vector<1x32x32xf32> to vector<32x32xf32>
    %cst_58 = arith.constant dense<0.000000e+00> : vector<16x32xf32>
    %161 = tpu.matmul %158, %160, %cst_58 {dimension_numbers = #tpu.dot_dimension_numbers<[1], [0], [0], [1], [0, 0, 1, 1], [], []>} : vector<16x32xf32>, vector<32x32xf32>, vector<16x32xf32> -> vector<16x32xf32>
    %162 = vector.extract_strided_slice %0 {offsets = [29, 0], sizes = [1, 32], strides = [1, 1]} : vector<39x32xf32> to vector<1x32xf32>
    %163 = vector.broadcast %162 : vector<1x32xf32> to vector<16x32xf32>
    %164 = arith.addf %161, %163 : vector<16x32xf32>
    %c8 = arith.constant 8 : index
    %c0_59 = arith.constant 0 : index
    %c0_60 = arith.constant 0 : index
    %165 = vector.load %arg2[%c8, %c0_59, %c0_60] : memref<13x32x32xf32, #tpu.memory_space<vmem>>, vector<1x32x32xf32>
    %166 = vector.shape_cast %165 : vector<1x32x32xf32> to vector<32x32xf32>
    %cst_61 = arith.constant dense<0.000000e+00> : vector<16x32xf32>
    %167 = tpu.matmul %134, %166, %cst_61 {dimension_numbers = #tpu.dot_dimension_numbers<[1], [0], [0], [1], [0, 0, 1, 1], [], []>} : vector<16x32xf32>, vector<32x32xf32>, vector<16x32xf32> -> vector<16x32xf32>
    %168 = vector.extract_strided_slice %0 {offsets = [30, 0], sizes = [1, 32], strides = [1, 1]} : vector<39x32xf32> to vector<1x32xf32>
    %169 = vector.broadcast %168 : vector<1x32xf32> to vector<16x32xf32>
    %170 = arith.addf %167, %169 : vector<16x32xf32>
    %c9 = arith.constant 9 : index
    %c0_62 = arith.constant 0 : index
    %c0_63 = arith.constant 0 : index
    %171 = vector.load %arg2[%c9, %c0_62, %c0_63] : memref<13x32x32xf32, #tpu.memory_space<vmem>>, vector<1x32x32xf32>
    %172 = vector.shape_cast %171 : vector<1x32x32xf32> to vector<32x32xf32>
    %cst_64 = arith.constant dense<0.000000e+00> : vector<16x32xf32>
    %173 = tpu.matmul %134, %172, %cst_64 {dimension_numbers = #tpu.dot_dimension_numbers<[1], [0], [0], [1], [0, 0, 1, 1], [], []>} : vector<16x32xf32>, vector<32x32xf32>, vector<16x32xf32> -> vector<16x32xf32>
    %174 = vector.extract_strided_slice %0 {offsets = [31, 0], sizes = [1, 32], strides = [1, 1]} : vector<39x32xf32> to vector<1x32xf32>
    %175 = vector.broadcast %174 : vector<1x32xf32> to vector<16x32xf32>
    %176 = arith.addf %173, %175 : vector<16x32xf32>
    %cst_65 = arith.constant dense<0.000000e+00> : vector<16x16xf32>
    %177 = tpu.matmul %164, %170, %cst_65 {dimension_numbers = #tpu.dot_dimension_numbers<[1], [1], [0], [0], [0, 0, 1, 0], [], []>} : vector<16x32xf32>, vector<16x32xf32>, vector<16x16xf32> -> vector<16x16xf32>
    %178 = arith.addf %177, %31 : vector<16x16xf32>
    %cst_66 = arith.constant dense<0xFF800000> : vector<16xf32>
    %179 = vector.multi_reduction <maximumf>, %178, %cst_66 [1] : vector<16x16xf32> to vector<16xf32>
    %180 = vector.shape_cast %179 : vector<16xf32> to vector<16x1xf32>
    %181 = vector.broadcast %180 : vector<16x1xf32> to vector<16x16xf32>
    %182 = arith.subf %178, %181 : vector<16x16xf32>
    %183 = math.exp %182 : vector<16x16xf32>
    %cst_67 = arith.constant dense<0.000000e+00> : vector<16xf32>
    %184 = vector.multi_reduction <add>, %183, %cst_67 [1] : vector<16x16xf32> to vector<16xf32>
    %185 = vector.shape_cast %184 : vector<16xf32> to vector<16x1xf32>
    %186 = tpu.reciprocal %185 : vector<16x1xf32> -> vector<16x1xf32>
    %187 = vector.broadcast %186 : vector<16x1xf32> to vector<16x16xf32>
    %188 = arith.mulf %183, %187 : vector<16x16xf32>
    %cst_68 = arith.constant dense<0.000000e+00> : vector<16x32xf32>
    %189 = tpu.matmul %188, %176, %cst_68 {dimension_numbers = #tpu.dot_dimension_numbers<[1], [0], [0], [1], [0, 0, 1, 1], [], []>} : vector<16x16xf32>, vector<16x32xf32>, vector<16x32xf32> -> vector<16x32xf32>
    %c10 = arith.constant 10 : index
    %c0_69 = arith.constant 0 : index
    %c0_70 = arith.constant 0 : index
    %190 = vector.load %arg2[%c10, %c0_69, %c0_70] : memref<13x32x32xf32, #tpu.memory_space<vmem>>, vector<1x32x32xf32>
    %191 = vector.shape_cast %190 : vector<1x32x32xf32> to vector<32x32xf32>
    %cst_71 = arith.constant dense<0.000000e+00> : vector<16x32xf32>
    %192 = tpu.matmul %189, %191, %cst_71 {dimension_numbers = #tpu.dot_dimension_numbers<[1], [0], [0], [1], [0, 0, 1, 1], [], []>} : vector<16x32xf32>, vector<32x32xf32>, vector<16x32xf32> -> vector<16x32xf32>
    %193 = vector.extract_strided_slice %0 {offsets = [32, 0], sizes = [1, 32], strides = [1, 1]} : vector<39x32xf32> to vector<1x32xf32>
    %194 = vector.broadcast %193 : vector<1x32xf32> to vector<16x32xf32>
    %195 = arith.addf %192, %194 : vector<16x32xf32>
    %196 = arith.addf %158, %195 : vector<16x32xf32>
    %197 = vector.extract_strided_slice %0 {offsets = [33, 0], sizes = [1, 32], strides = [1, 1]} : vector<39x32xf32> to vector<1x32xf32>
    %198 = vector.extract_strided_slice %0 {offsets = [34, 0], sizes = [1, 32], strides = [1, 1]} : vector<39x32xf32> to vector<1x32xf32>
    %cst_72 = arith.constant dense<0.000000e+00> : vector<16xf32>
    %199 = vector.multi_reduction <add>, %196, %cst_72 [1] : vector<16x32xf32> to vector<16xf32>
    %200 = vector.shape_cast %199 : vector<16xf32> to vector<16x1xf32>
    %cst_73 = arith.constant 3.200000e+01 : f32
    %201 = vector.broadcast %cst_73 : f32 to vector<16x1xf32>
    %202 = arith.divf %200, %201 : vector<16x1xf32>
    %203 = vector.broadcast %202 : vector<16x1xf32> to vector<16x32xf32>
    %204 = arith.subf %196, %203 : vector<16x32xf32>
    %205 = arith.mulf %204, %204 : vector<16x32xf32>
    %cst_74 = arith.constant dense<0.000000e+00> : vector<16xf32>
    %206 = vector.multi_reduction <add>, %205, %cst_74 [1] : vector<16x32xf32> to vector<16xf32>
    %207 = vector.shape_cast %206 : vector<16xf32> to vector<16x1xf32>
    %cst_75 = arith.constant 3.200000e+01 : f32
    %208 = vector.broadcast %cst_75 : f32 to vector<16x1xf32>
    %209 = arith.divf %207, %208 : vector<16x1xf32>
    %210 = vector.broadcast %202 : vector<16x1xf32> to vector<16x32xf32>
    %211 = arith.subf %196, %210 : vector<16x32xf32>
    %cst_76 = arith.constant 9.99999993E-9 : f32
    %212 = vector.broadcast %cst_76 : f32 to vector<16x1xf32>
    %213 = arith.addf %209, %212 : vector<16x1xf32>
    %214 = math.rsqrt %213 : vector<16x1xf32>
    %215 = vector.broadcast %214 : vector<16x1xf32> to vector<16x32xf32>
    %216 = arith.mulf %211, %215 : vector<16x32xf32>
    %217 = vector.broadcast %197 : vector<1x32xf32> to vector<16x32xf32>
    %218 = arith.mulf %216, %217 : vector<16x32xf32>
    %219 = vector.broadcast %198 : vector<1x32xf32> to vector<16x32xf32>
    %220 = arith.addf %218, %219 : vector<16x32xf32>
    %c11 = arith.constant 11 : index
    %c0_77 = arith.constant 0 : index
    %c0_78 = arith.constant 0 : index
    %221 = vector.load %arg2[%c11, %c0_77, %c0_78] : memref<13x32x32xf32, #tpu.memory_space<vmem>>, vector<1x32x32xf32>
    %222 = vector.shape_cast %221 : vector<1x32x32xf32> to vector<32x32xf32>
    %cst_79 = arith.constant dense<0.000000e+00> : vector<16x32xf32>
    %223 = tpu.matmul %220, %222, %cst_79 {dimension_numbers = #tpu.dot_dimension_numbers<[1], [0], [0], [1], [0, 0, 1, 1], [], []>} : vector<16x32xf32>, vector<32x32xf32>, vector<16x32xf32> -> vector<16x32xf32>
    %224 = vector.extract_strided_slice %0 {offsets = [35, 0], sizes = [1, 32], strides = [1, 1]} : vector<39x32xf32> to vector<1x32xf32>
    %225 = vector.broadcast %224 : vector<1x32xf32> to vector<16x32xf32>
    %226 = arith.addf %223, %225 : vector<16x32xf32>
    %cst_80 = arith.constant 0.000000e+00 : f32
    %227 = vector.broadcast %cst_80 : f32 to vector<16x32xf32>
    %228 = arith.maximumf %226, %227 : vector<16x32xf32>
    %c12 = arith.constant 12 : index
    %c0_81 = arith.constant 0 : index
    %c0_82 = arith.constant 0 : index
    %229 = vector.load %arg2[%c12, %c0_81, %c0_82] : memref<13x32x32xf32, #tpu.memory_space<vmem>>, vector<1x32x32xf32>
    %230 = vector.shape_cast %229 : vector<1x32x32xf32> to vector<32x32xf32>
    %cst_83 = arith.constant dense<0.000000e+00> : vector<16x32xf32>
    %231 = tpu.matmul %228, %230, %cst_83 {dimension_numbers = #tpu.dot_dimension_numbers<[1], [0], [0], [1], [0, 0, 1, 1], [], []>} : vector<16x32xf32>, vector<32x32xf32>, vector<16x32xf32> -> vector<16x32xf32>
    %232 = vector.extract_strided_slice %0 {offsets = [36, 0], sizes = [1, 32], strides = [1, 1]} : vector<39x32xf32> to vector<1x32xf32>
    %233 = vector.broadcast %232 : vector<1x32xf32> to vector<16x32xf32>
    %234 = arith.addf %231, %233 : vector<16x32xf32>
    %235 = arith.addf %234, %220 : vector<16x32xf32>
    %236 = vector.broadcast %26 : vector<16x1xf32> to vector<16x32xf32>
    %237 = arith.mulf %235, %236 : vector<16x32xf32>
    %238 = vector.extract_strided_slice %0 {offsets = [37, 0], sizes = [1, 32], strides = [1, 1]} : vector<39x32xf32> to vector<1x32xf32>
    %239 = vector.extract_strided_slice %0 {offsets = [38, 0], sizes = [1, 32], strides = [1, 1]} : vector<39x32xf32> to vector<1x32xf32>
    %cst_84 = arith.constant dense<0.000000e+00> : vector<16xf32>
    %240 = vector.multi_reduction <add>, %237, %cst_84 [1] : vector<16x32xf32> to vector<16xf32>
    %241 = vector.shape_cast %240 : vector<16xf32> to vector<16x1xf32>
    %cst_85 = arith.constant 3.200000e+01 : f32
    %242 = vector.broadcast %cst_85 : f32 to vector<16x1xf32>
    %243 = arith.divf %241, %242 : vector<16x1xf32>
    %244 = vector.broadcast %243 : vector<16x1xf32> to vector<16x32xf32>
    %245 = arith.subf %237, %244 : vector<16x32xf32>
    %246 = arith.mulf %245, %245 : vector<16x32xf32>
    %cst_86 = arith.constant dense<0.000000e+00> : vector<16xf32>
    %247 = vector.multi_reduction <add>, %246, %cst_86 [1] : vector<16x32xf32> to vector<16xf32>
    %248 = vector.shape_cast %247 : vector<16xf32> to vector<16x1xf32>
    %cst_87 = arith.constant 3.200000e+01 : f32
    %249 = vector.broadcast %cst_87 : f32 to vector<16x1xf32>
    %250 = arith.divf %248, %249 : vector<16x1xf32>
    %251 = vector.broadcast %243 : vector<16x1xf32> to vector<16x32xf32>
    %252 = arith.subf %237, %251 : vector<16x32xf32>
    %cst_88 = arith.constant 9.99999993E-9 : f32
    %253 = vector.broadcast %cst_88 : f32 to vector<16x1xf32>
    %254 = arith.addf %250, %253 : vector<16x1xf32>
    %255 = math.rsqrt %254 : vector<16x1xf32>
    %256 = vector.broadcast %255 : vector<16x1xf32> to vector<16x32xf32>
    %257 = arith.mulf %252, %256 : vector<16x32xf32>
    %258 = vector.broadcast %238 : vector<1x32xf32> to vector<16x32xf32>
    %259 = arith.mulf %257, %258 : vector<16x32xf32>
    %260 = vector.broadcast %239 : vector<1x32xf32> to vector<16x32xf32>
    %261 = arith.addf %259, %260 : vector<16x32xf32>
    %262 = tpu.concatenate %261, %261 in 0 : vector<16x32xf32>, vector<16x32xf32> -> vector<32x32xf32>
    %263 = arith.mulf %262, %21 : vector<32x32xf32>
    %cst_89 = arith.constant dense<0.000000e+00> : vector<32xf32>
    %264 = vector.multi_reduction <add>, %263, %cst_89 [1] : vector<32x32xf32> to vector<32xf32>
    %265 = vector.shape_cast %264 : vector<32xf32> to vector<32x1xf32>
    %c0_90 = arith.constant 0 : index
    %c0_91 = arith.constant 0 : index
    %266 = vector.load %arg6[%c0_90, %c0_91] : memref<32x1xf32, #tpu.memory_space<vmem>>, vector<32x1xf32>
    tpu.vector_store %arg6[%c0_90, %c0_91], %265 {strides = array<i32>} : memref<32x1xf32, #tpu.memory_space<vmem>>, vector<32x1xf32>,
    return
  }
}

</mosaic_0001>

<llo_original>
// kernel: eq.8
$region0: #{eq.8}
  %s0 = inlined_call_operand.vmem [shape: s32[2,8], index: 0, kind: input, shape index: {}]
  %s1 = inlined_call_operand.vmem [shape: s32[16], index: 1, kind: output, shape index: {}]
  $region1: #{eq.8} parent=0
    #allocation0 [shape = 'u8[4096]{0}', space=vmem, size = 0x1000, scoped, tag = 'scoped mem for output reshape']
    #allocation1 [shape = 'u8[4096]{0}', space=vmem, size = 0x1000, scoped, tag = 'scoped mem for input reshape']
    %s3 = sshll.u32 1, 2
    %s4 = ssub.s32 %s3, 1
    %v5 = vld [vmem:[%s0] sm:%s4]
    %6 = vst [vmem:[#allocation1] sm:%s4] %v5
    %v7 = vld [vmem:[#allocation1] sm:$0x1]
    %vm8 = vcmask 64512
    %9 = vst.msk [vmem:[#allocation0] sm:$0x1] %vm8, %v7
    %s10 = scalar_lea.vmem [#allocation1], 1
    %v11 = vld [vmem:[%s10] sm:$0x1]
    %12 = vrot.lane.b32.xlu0 %v11, 8
    %v13 = vpop.permute.xlu0 %12
    %vm14 = vcmask 130112
    %15 = vst.msk [vmem:[#allocation0] sm:$0x1] %vm14, %v13
    %s17 = sshll.u32 1, 1
    %s18 = ssub.s32 %s17, 1
    %v20 = vld [vmem:[#allocation0] sm:%s18]
    %s21 = sshll.u32 1, 1
    %s22 = ssub.s32 %s21, 1
    %23 = vst [vmem:[%s1] sm:%s22] %v20

// kernel: squeeze.2
$region0: #{squeeze.2}
  %s0 = inlined_call_operand.vmem [shape: f32[16], index: 0, kind: input, shape index: {}]
  %s1 = inlined_call_operand.hbm [shape: f32[2,8], index: 1, kind: output, shape index: {}]
  $region1: #{squeeze.2} parent=0
    #allocation0 [shape = 'u8[1024]{0}', space=vmem, size = 0x400, scoped, tag = 'operand span for operand 1']
    #allocation1 [shape = 's32[1]{0}', space=sflag, size = 0x4, scoped, tag = 'scoped memory for squeeze.2']
    #allocation2 [shape = 'u8[4096]{0}', space=vmem, size = 0x1000, scoped, tag = 'scoped mem for output reshape']
    #allocation3 [shape = 'u8[4096]{0}', space=vmem, size = 0x1000, scoped, tag = 'scoped mem for input reshape']
    %2 = vsyncpa [#allocation1], 0
    %s4 = sshll.u32 1, 1
    %s5 = ssub.s32 %s4, 1
    %v6 = vld [vmem:[%s0] sm:%s5]
    %7 = vst [vmem:[#allocation3] sm:%s5] %v6
    %v8 = vld [vmem:[#allocation3] sm:$0x1]
    %vm9 = vcmask 64512
    %10 = vst.msk [vmem:[#allocation2] sm:$0x1] %vm9, %v8
    %v11 = vld [vmem:[#allocation3] sm:$0x1]
    %12 = vrot.lane.b32.xlu0 %v11, 120
    %v13 = vpop.permute.xlu0 %12
    %vm14 = vcmask 64512
    %s15 = scalar_lea.vmem [#allocation2], 1
    %16 = vst.msk [vmem:[%s15] sm:$0x1] %vm14, %v13
    %s18 = sshll.u32 1, 2
    %s19 = ssub.s32 %s18, 1
    %v21 = vld [vmem:[#allocation2] sm:%s19]
    %s22 = sshll.u32 1, 2
    %s23 = ssub.s32 %s22, 1
    %24 = vst [vmem:[#allocation0] sm:%s23] %v21
    %s26 = ssub.s32 32, 32
    %27 = vsyncadd [#allocation1], %s26
    %s29 = sshll.u32 [#allocation0], 4
    %s30 = int_to_ptr.vmem [resolvable:$true] %s29
    %32 = dma.vmem_to_hbm [thread:$0]  %s30, 32, %s1, [#allocation1]
    %33 = dma.done [#allocation1], 32
    %34 = vsyncpa [#allocation1], 1

// kernel: sasrec_forward.1
$region0: #{sasrec_forward.1}
  #allocation0 [shape = 'u32[]', space=smem, size = 0x4, offset = 0x4, fixed_abs, tag = 'smem constant byte address 0x4 - core index']
  #allocation1 [shape = 'u32[144,128]{1,0:T(1,128)}', space=vmem, size = 0x12000, scoped, tag = 'internal scratch']
  %s0 = inlined_call_operand.vmem [shape: f32[64,64], index: 0, kind: input, shape index: {}]
  %s1 = inlined_call_operand.vmem [shape: f32[64,32], index: 1, kind: input, shape index: {}]
  %s2 = inlined_call_operand.vmem [shape: f32[13,32,32], index: 2, kind: input, shape index: {}]
  %s3 = inlined_call_operand.vmem [shape: f32[39,32], index: 3, kind: input, shape index: {}]
  %s4 = inlined_call_operand.vmem [shape: s32[48,1], index: 4, kind: input, shape index: {}]
  %s5 = inlined_call_operand.vmem [shape: f32[16,16], index: 5, kind: input, shape index: {}]
  %s6 = inlined_call_operand.vmem [shape: f32[32,1], index: 6, kind: output, shape index: {}]
  %s7 = sld [smem:[#allocation0]]
  $region34: #{sasrec_forward.1} parent=0
    _
  %s9 = ssub.s32 1, %s7
  %s10 = scalar_select 0, %s9, %s7
  // Predicated region
  $region2: #{sasrec_forward.1} parent=0 // pred_check
    _
  $region3: #{sasrec_forward.1} parent=0 // pred_check_branch
    %12 = sbr.rel (0) target = $region5
  $region4: #{sasrec_forward.1} parent=0 // pred_region
    _
  $region5: #{sasrec_forward.1} parent=0 // pred_fallthru
    _
  // Predicated region
  $region6: #{sasrec_forward.1} parent=0 // pred_check
    _
  $region7: #{sasrec_forward.1} parent=0 // pred_check_branch
    %14 = sbr.rel (0) target = $region9
  $region8: #{sasrec_forward.1} parent=0 // pred_region
    _
  $region9: #{sasrec_forward.1} parent=0 // pred_fallthru
    _
  // Predicated region
  $region10: #{sasrec_forward.1} parent=0 // pred_check
    _
  $region11: #{sasrec_forward.1} parent=0 // pred_check_branch
    %16 = sbr.rel (0) target = $region13
  $region12: #{sasrec_forward.1} parent=0 // pred_region
    _
  $region13: #{sasrec_forward.1} parent=0 // pred_fallthru
    _
  // Predicated region
  $region14: #{sasrec_forward.1} parent=0 // pred_check
    _
  $region15: #{sasrec_forward.1} parent=0 // pred_check_branch
    %18 = sbr.rel (0) target = $region17
  $region16: #{sasrec_forward.1} parent=0 // pred_region
    _
  $region17: #{sasrec_forward.1} parent=0 // pred_fallthru
    _
  // Predicated region
  $region18: #{sasrec_forward.1} parent=0 // pred_check
    _
  $region19: #{sasrec_forward.1} parent=0 // pred_check_branch
    %20 = sbr.rel (0) target = $region21
  $region20: #{sasrec_forward.1} parent=0 // pred_region
    _
  $region21: #{sasrec_forward.1} parent=0 // pred_fallthru
    _
  // Predicated region
  $region22: #{sasrec_forward.1} parent=0 // pred_check
    _
  $region23: #{sasrec_forward.1} parent=0 // pred_check_branch
    %22 = sbr.rel (0) target = $region25
  $region24: #{sasrec_forward.1} parent=0 // pred_region
    _
  $region25: #{sasrec_forward.1} parent=0 // pred_fallthru
    _
  %v23 = vld [vmem:[%s3] sm:$0xff]
  %v24 = vld [vmem:[%s3 + $0x8] sm:$0xff]
  %v25 = vld [vmem:[%s3 + $0x10] sm:$0xff]
  %v26 = vld [vmem:[%s3 + $0x18] sm:$0xff]
  %v27 = vld [vmem:[%s3 + $0x20] sm:$0x7f]
  %v28 = vld [vmem:[%s1] sm:$0xff]
  %v29 = vld [vmem:[%s1 + $0x8] sm:$0xff]
  %v30 = vld [vmem:[%s1 + $0x10] sm:$0xff]
  %v31 = vld [vmem:[%s1 + $0x18] sm:$0xff]
  %v32 = vld [vmem:[%s1 + $0x20] sm:$0xff]
  %v33 = vld [vmem:[%s1 + $0x28] sm:$0xff]
  %v34 = vld [vmem:[%s1 + $0x30] sm:$0xff]
  %v35 = vld [vmem:[%s1 + $0x38] sm:$0xff]
  %v36 = vld [vmem:[%s0] sm:$0xff]
  %v37 = vld [vmem:[%s0 + $0x8] sm:$0xff]
  %v38 = vld [vmem:[%s0 + $0x10] sm:$0xff]
  %v39 = vld [vmem:[%s0 + $0x18] sm:$0xff]
  %v40 = vld [vmem:[%s0 + $0x20] sm:$0xff]
  %v41 = vld [vmem:[%s0 + $0x28] sm:$0xff]
  %v42 = vld [vmem:[%s0 + $0x30] sm:$0xff]
  %v43 = vld [vmem:[%s0 + $0x38] sm:$0xff]
  %vm44 = vcmask 523264
  %v46 = vsel %vm44, %v36, 0
  %v49 = vsel %vm44, %v37, 0
  %v52 = vsel %vm44, %v38, 0
  %v55 = vsel %vm44, %v39, 0
  %v58 = vsel %vm44, %v40, 0
  %v61 = vsel %vm44, %v41, 0
  %v64 = vsel %vm44, %v42, 0
  %v67 = vsel %vm44, %v43, 0
  %69 = vmatprep.subr.mxu0 0.0
  %70 = vmatpush1.msra.mxu0 0.0
  %71 = vmatprep.subr.mxu0 0.0
  %72 = vmatpush1.msra.mxu0 0.0
  %73 = vmatprep.subr.mxu0 0.0
  %74 = vmatpush1.msra.mxu0 0.0
  %75 = vmatprep.subr.mxu0 0.0
  %76 = vmatpush1.msra.mxu0 0.0
  %77 = vmatprep.subr.mxu0 0.0
  %78 = vmatpush1.msra.mxu0 0.0
  %79 = vmatprep.subr.mxu0 0.0
  %80 = vmatpush1.msra.mxu0 0.0
  %81 = vmatprep.subr.mxu0 0.0
  %82 = vmatpush1.msra.mxu0 0.0
  %83 = vmatprep.subr.mxu0 0.0
  %84 = vmatpush1.msra.mxu0 0.0
  %85 = vmatprep.subr.mxu0 0.0
  %86 = vmatpush1.msra.mxu0 %v35
  %87 = vmatprep.subr.mxu0 0.0
  %88 = vmatpush1.msra.mxu0 %v34
  %89 = vmatprep.subr.mxu0 0.0
  %90 = vmatpush1.msra.mxu0 %v33
  %91 = vmatprep.subr.mxu0 0.0
  %92 = vmatpush1.msra.mxu0 %v32
  %93 = vmatprep.subr.mxu0 0.0
  %94 = vmatpush1.msra.mxu0 %v31
  %95 = vmatprep.subr.mxu0 0.0
  %96 = vmatpush1.msra.mxu0 %v30
  %97 = vmatprep.subr.mxu0 0.0
  %98 = vmatpush1.msra.mxu0 %v29
  %99 = vmatprep.subr.mxu0 0.0
  %100 = vmatpush1.msra.mxu0 %v28
  %101 = vmatprep.subr.mxu0 0.0
  %102 = vmatpush2.msra.mxu0 0.0
  %103 = vmatprep.subr.mxu0 0.0
  %104 = vmatpush2.msra.mxu0 0.0
  %105 = vmatprep.subr.mxu0 0.0
  %106 = vmatpush2.msra.mxu0 0.0
  %107 = vmatprep.subr.mxu0 0.0
  %108 = vmatpush2.msra.mxu0 0.0
  %109 = vmatprep.subr.mxu0 0.0
  %110 = vmatpush2.msra.mxu0 0.0
  %111 = vmatprep.subr.mxu0 0.0
  %112 = vmatpush2.msra.mxu0 0.0
  %113 = vmatprep.subr.mxu0 0.0
  %114 = vmatpush2.msra.mxu0 0.0
  %115 = vmatprep.subr.mxu0 0.0
  %116 = vmatpush2.msra.mxu0 0.0
  %117 = vmatprep.subr.mxu0 0.0
  %118 = vmatpush2.msra.mxu0 0.0
  %119 = vmatprep.subr.mxu0 0.0
  %120 = vmatpush2.msra.mxu0 0.0
  %121 = vmatprep.subr.mxu0 0.0
  %122 = vmatpush2.msra.mxu0 0.0
  %123 = vmatprep.subr.mxu0 0.0
  %124 = vmatpush2.msra.mxu0 0.0
  %125 = vmatprep.subr.mxu0 0.0
  %126 = vmatpush2.msra.mxu0 0.0
  %127 = vmatprep.subr.mxu0 0.0
  %128 = vmatpush2.msra.mxu0 0.0
  %129 = vmatprep.subr.mxu0 0.0
  %130 = vmatpush2.msra.mxu0 0.0
  %131 = vmatprep.subr.mxu0 0.0
  %132 = vmatpush2.msra.mxu0 0.0
  %133 = vmatprep.mubr.f32.mxu0 0.0
  %134 = vmatmul.mubr.f32.gmra.mxu0 %v46
  %v135 = vpop.f32.mrf.mxu0
  %v136 = vadd.f32 0.0, %v135
  %v137 = vpop.f32.mrf.mxu0
  %138 = vmatprep.mubr.f32.mxu0 0.0
  %139 = vmatmul.mubr.f32.gmra.mxu0 %v49
  %v140 = vpop.f32.mrf.mxu0
  %v141 = vadd.f32 0.0, %v140
  %v142 = vpop.f32.mrf.mxu0
  %143 = vmatprep.mubr.f32.mxu0 0.0
  %144 = vmatmul.mubr.f32.gmra.mxu0 %v52
  %v145 = vpop.f32.mrf.mxu0
  %v146 = vadd.f32 0.0, %v145
  %v147 = vpop.f32.mrf.mxu0
  %148 = vmatprep.mubr.f32.mxu0 0.0
  %149 = vmatmul.mubr.f32.gmra.mxu0 %v55
  %v150 = vpop.f32.mrf.mxu0
  %v151 = vadd.f32 0.0, %v150
  %v152 = vpop.f32.mrf.mxu0
  %153 = vmatprep.mubr.f32.mxu0 0.0
  %154 = vmatmul.mubr.f32.gmra.mxu0 %v58
  %v155 = vpop.f32.mrf.mxu0
  %v156 = vadd.f32 0.0, %v155
  %v157 = vpop.f32.mrf.mxu0
  %158 = vmatprep.mubr.f32.mxu0 0.0
  %159 = vmatmul.mubr.f32.gmra.mxu0 %v61
  %v160 = vpop.f32.mrf.mxu0
  %v161 = vadd.f32 0.0, %v160
  %v162 = vpop.f32.mrf.mxu0
  %163 = vmatprep.mubr.f32.mxu0 0.0
  %164 = vmatmul.mubr.f32.gmra.mxu0 %v64
  %v165 = vpop.f32.mrf.mxu0
  %v166 = vadd.f32 0.0, %v165
  %v167 = vpop.f32.mrf.mxu0
  %168 = vmatprep.mubr.f32.mxu0 0.0
  %169 = vmatmul.mubr.f32.gmra.mxu0 %v67
  %v170 = vpop.f32.mrf.mxu0
  %v171 = vadd.f32 0.0, %v170
  %v172 = vpop.f32.mrf.mxu0
  %173 = vdwg.mxu0
  %v174 = vld [vmem:[%s2] sm:$0xff]
  %v175 = vld [vmem:[%s2 + $0x8] sm:$0xff]
  %v176 = vld [vmem:[%s2 + $0x10] sm:$0xff]
  %v177 = vld [vmem:[%s2 + $0x18] sm:$0xff]
  %v178 = vlaneseq
  %v179 = vshrl.u32 %v178, 7
  %v180 = vsub.s32 0, %v179
  %v181 = vrot.slane %v25, %v180
  %vm182 = vcmask 261120
  %v184 = vsel %vm182, %v136, 0
  %v187 = vsel %vm182, %v141, 0
  %v190 = vsel %vm182, %v146, 0
  %v193 = vsel %vm182, %v151, 0
  %v196 = vsel %vm182, %v156, 0
  %v199 = vsel %vm182, %v161, 0
  %v202 = vsel %vm182, %v166, 0
  %v205 = vsel %vm182, %v171, 0
  %207 = vmatprep.subr.mxu0 0.0
  %208 = vmatpush1.msra.mxu0 0.0
  %209 = vmatprep.subr.mxu0 0.0
  %210 = vmatpush1.msra.mxu0 0.0
  %211 = vmatprep.subr.mxu0 0.0
  %212 = vmatpush1.msra.mxu0 0.0
  %213 = vmatprep.subr.mxu0 0.0
  %214 = vmatpush1.msra.mxu0 0.0
  %215 = vmatprep.subr.mxu0 0.0
  %216 = vmatpush1.msra.mxu0 0.0
  %217 = vmatprep.subr.mxu0 0.0
  %218 = vmatpush1.msra.mxu0 0.0
  %219 = vmatprep.subr.mxu0 0.0
  %220 = vmatpush1.msra.mxu0 0.0
  %221 = vmatprep.subr.mxu0 0.0
  %222 = vmatpush1.msra.mxu0 0.0
  %223 = vmatprep.subr.mxu0 0.0
  %224 = vmatpush1.msra.mxu0 0.0
  %225 = vmatprep.subr.mxu0 0.0
  %226 = vmatpush1.msra.mxu0 0.0
  %227 = vmatprep.subr.mxu0 0.0
  %228 = vmatpush1.msra.mxu0 0.0
  %229 = vmatprep.subr.mxu0 0.0
  %230 = vmatpush1.msra.mxu0 0.0
  %231 = vmatprep.subr.mxu0 0.0
  %232 = vmatpush1.msra.mxu0 %v177
  %233 = vmatprep.subr.mxu0 0.0
  %234 = vmatpush1.msra.mxu0 %v176
  %235 = vmatprep.subr.mxu0 0.0
  %236 = vmatpush1.msra.mxu0 %v175
  %237 = vmatprep.subr.mxu0 0.0
  %238 = vmatpush1.msra.mxu0 %v174
  %239 = vmatprep.subr.mxu0 0.0
  %240 = vmatpush2.msra.mxu0 0.0
  %241 = vmatprep.subr.mxu0 0.0
  %242 = vmatpush2.msra.mxu0 0.0
  %243 = vmatprep.subr.mxu0 0.0
  %244 = vmatpush2.msra.mxu0 0.0
  %245 = vmatprep.subr.mxu0 0.0
  %246 = vmatpush2.msra.mxu0 0.0
  %247 = vmatprep.subr.mxu0 0.0
  %248 = vmatpush2.msra.mxu0 0.0
  %249 = vmatprep.subr.mxu0 0.0
  %250 = vmatpush2.msra.mxu0 0.0
  %251 = vmatprep.subr.mxu0 0.0
  %252 = vmatpush2.msra.mxu0 0.0
  %253 = vmatprep.subr.mxu0 0.0
  %254 = vmatpush2.msra.mxu0 0.0
  %255 = vmatprep.subr.mxu0 0.0
  %256 = vmatpush2.msra.mxu0 0.0
  %257 = vmatprep.subr.mxu0 0.0
  %258 = vmatpush2.msra.mxu0 0.0
  %259 = vmatprep.subr.mxu0 0.0
  %260 = vmatpush2.msra.mxu0 0.0
  %261 = vmatprep.subr.mxu0 0.0
  %262 = vmatpush2.msra.mxu0 0.0
  %263 = vmatprep.subr.mxu0 0.0
  %264 = vmatpush2.msra.mxu0 0.0
  %265 = vmatprep.subr.mxu0 0.0
  %266 = vmatpush2.msra.mxu0 0.0
  %267 = vmatprep.subr.mxu0 0.0
  %268 = vmatpush2.msra.mxu0 0.0
  %269 = vmatprep.subr.mxu0 0.0
  %270 = vmatpush2.msra.mxu0 0.0
  %271 = vmatprep.mubr.f32.mxu0 0.0
  %272 = vmatmul.mubr.f32.gmra.mxu0 %v184
  %v273 = vpop.f32.mrf.mxu0
  %v274 = vadd.f32 %v181, %v273
  %v275 = vpop.f32.mrf.mxu0
  %276 = vmatprep.mubr.f32.mxu0 0.0
  %277 = vmatmul.mubr.f32.gmra.mxu0 %v187
  %v278 = vpop.f32.mrf.mxu0
  %v279 = vadd.f32 %v181, %v278
  %v280 = vpop.f32.mrf.mxu0
  %281 = vmatprep.mubr.f32.mxu0 0.0
  %282 = vmatmul.mubr.f32.gmra.mxu0 %v190
  %v283 = vpop.f32.mrf.mxu0
  %v284 = vadd.f32 %v181, %v283
  %v285 = vpop.f32.mrf.mxu0
  %286 = vmatprep.mubr.f32.mxu0 0.0
  %287 = vmatmul.mubr.f32.gmra.mxu0 %v193
  %v288 = vpop.f32.mrf.mxu0
  %v289 = vadd.f32 %v181, %v288
  %v290 = vpop.f32.mrf.mxu0
  %291 = vmatprep.mubr.f32.mxu0 0.0
  %292 = vmatmul.mubr.f32.gmra.mxu0 %v196
  %v293 = vpop.f32.mrf.mxu0
  %v294 = vadd.f32 %v181, %v293
  %v295 = vpop.f32.mrf.mxu0
  %296 = vmatprep.mubr.f32.mxu0 0.0
  %297 = vmatmul.mubr.f32.gmra.mxu0 %v199
  %v298 = vpop.f32.mrf.mxu0
  %v299 = vadd.f32 %v181, %v298
  %v300 = vpop.f32.mrf.mxu0
  %301 = vmatprep.mubr.f32.mxu0 0.0
  %302 = vmatmul.mubr.f32.gmra.mxu0 %v202
  %v303 = vpop.f32.mrf.mxu0
  %v304 = vadd.f32 %v181, %v303
  %v305 = vpop.f32.mrf.mxu0
  %306 = vmatprep.mubr.f32.mxu0 0.0
  %307 = vmatmul.mubr.f32.gmra.mxu0 %v205
  %v308 = vpop.f32.mrf.mxu0
  %v309 = vadd.f32 %v181, %v308
  %v310 = vpop.f32.mrf.mxu0
  %311 = vdwg.mxu0
  %v312 = vmax.f32 %v274, 0.0
  %v313 = vmax.f32 %v279, 0.0
  %v314 = vmax.f32 %v284, 0.0
  %v315 = vmax.f32 %v289, 0.0
  %v316 = vmax.f32 %v294, 0.0
  %v317 = vmax.f32 %v299, 0.0
  %v318 = vmax.f32 %v304, 0.0
  %v319 = vmax.f32 %v309, 0.0
  %v320 = vlaneseq
  %v321 = vand.u32 %v320, 127
  %v322 = vld [vmem:[%s4] sm:$0xff]
  %v323 = vld [vmem:[%s4 + $0x8] sm:$0xff]
  %v324 = vld [vmem:[%s4 + $0x10] sm:$0xff]
  %v325 = vld [vmem:[%s4 + $0x18] sm:$0xff]
  %v326 = vld [vmem:[%s4 + $0x20] sm:$0xff]
  %v327 = vld [vmem:[%s4 + $0x28] sm:$0xff]
  %328 = vset.pattern.permute.xlu0 0
  %329 = vperm.xlu0 %328, %v322
  %v330 = vpop.permute.xlu0 %329
  %331 = vset.pattern.permute.xlu0 0
  %332 = vperm.xlu0 %331, %v323
  %v333 = vpop.permute.xlu0 %332
  %334 = vset.pattern.permute.xlu0 0
  %335 = vperm.xlu0 %334, %v324
  %v336 = vpop.permute.xlu0 %335
  %337 = vset.pattern.permute.xlu0 0
  %338 = vperm.xlu0 %337, %v325
  %v339 = vpop.permute.xlu0 %338
  %340 = vset.pattern.permute.xlu0 0
  %341 = vperm.xlu0 %340, %v326
  %v342 = vpop.permute.xlu0 %341
  %343 = vset.pattern.permute.xlu0 0
  %344 = vperm.xlu0 %343, %v327
  %v345 = vpop.permute.xlu0 %344
  %vm346 = vcmp.eq.s32.totalorder %v330, %v321
  %vm347 = vcmp.eq.s32.totalorder %v333, %v321
  %vm348 = vcmp.eq.s32.totalorder %v336, %v321
  %vm349 = vcmp.eq.s32.totalorder %v339, %v321
  %vm350 = vcmp.eq.s32.totalorder %v342, %v321
  %vm351 = vcmp.eq.s32.totalorder %v345, %v321
  %v352 = vsel %vm346, 1, 0
  %v353 = vsel %vm347, 1, 0
  %v354 = vsel %vm348, 1, 0
  %v355 = vsel %vm349, 1, 0
  %v356 = vsel %vm350, 1, 0
  %v357 = vsel %vm351, 1, 0
  %v358 = vcvt.s32.f32 %v352
  %v359 = vcvt.s32.f32 %v353
  %v360 = vcvt.s32.f32 %v354
  %v361 = vcvt.s32.f32 %v355
  %v362 = vcvt.s32.f32 %v356
  %v363 = vcvt.s32.f32 %v357
  %v365 = vsel %vm44, %v360, 0
  %v368 = vsel %vm44, %v361, 0
  %v371 = vsel %vm44, %v362, 0
  %v374 = vsel %vm44, %v363, 0
  %376 = vmatprep.subr.mxu0 0.0
  %377 = vmatpush1.msra.mxu0 0.0
  %378 = vmatprep.subr.mxu0 0.0
  %379 = vmatpush1.msra.mxu0 0.0
  %380 = vmatprep.subr.mxu0 0.0
  %381 = vmatpush1.msra.mxu0 0.0
  %382 = vmatprep.subr.mxu0 0.0
  %383 = vmatpush1.msra.mxu0 0.0
  %384 = vmatprep.subr.mxu0 0.0
  %385 = vmatpush1.msra.mxu0 0.0
  %386 = vmatprep.subr.mxu0 0.0
  %387 = vmatpush1.msra.mxu0 0.0
  %388 = vmatprep.subr.mxu0 0.0
  %389 = vmatpush1.msra.mxu0 0.0
  %390 = vmatprep.subr.mxu0 0.0
  %391 = vmatpush1.msra.mxu0 0.0
  %392 = vmatprep.subr.mxu0 0.0
  %393 = vmatpush1.msra.mxu0 %v35
  %394 = vmatprep.subr.mxu0 0.0
  %395 = vmatpush1.msra.mxu0 %v34
  %396 = vmatprep.subr.mxu0 0.0
  %397 = vmatpush1.msra.mxu0 %v33
  %398 = vmatprep.subr.mxu0 0.0
  %399 = vmatpush1.msra.mxu0 %v32
  %400 = vmatprep.subr.mxu0 0.0
  %401 = vmatpush1.msra.mxu0 %v31
  %402 = vmatprep.subr.mxu0 0.0
  %403 = vmatpush1.msra.mxu0 %v30
  %404 = vmatprep.subr.mxu0 0.0
  %405 = vmatpush1.msra.mxu0 %v29
  %406 = vmatprep.subr.mxu0 0.0
  %407 = vmatpush1.msra.mxu0 %v28
  %408 = vmatprep.subr.mxu0 0.0
  %409 = vmatpush2.msra.mxu0 0.0
  %410 = vmatprep.subr.mxu0 0.0
  %411 = vmatpush2.msra.mxu0 0.0
  %412 = vmatprep.subr.mxu0 0.0
  %413 = vmatpush2.msra.mxu0 0.0
  %414 = vmatprep.subr.mxu0 0.0
  %415 = vmatpush2.msra.mxu0 0.0
  %416 = vmatprep.subr.mxu0 0.0
  %417 = vmatpush2.msra.mxu0 0.0
  %418 = vmatprep.subr.mxu0 0.0
  %419 = vmatpush2.msra.mxu0 0.0
  %420 = vmatprep.subr.mxu0 0.0
  %421 = vmatpush2.msra.mxu0 0.0
  %422 = vmatprep.subr.mxu0 0.0
  %423 = vmatpush2.msra.mxu0 0.0
  %424 = vmatprep.subr.mxu0 0.0
  %425 = vmatpush2.msra.mxu0 0.0
  %426 = vmatprep.subr.mxu0 0.0
  %427 = vmatpush2.msra.mxu0 0.0
  %428 = vmatprep.subr.mxu0 0.0
  %429 = vmatpush2.msra.mxu0 0.0
  %430 = vmatprep.subr.mxu0 0.0
  %431 = vmatpush2.msra.mxu0 0.0
  %432 = vmatprep.subr.mxu0 0.0
  %433 = vmatpush2.msra.mxu0 0.0
  %434 = vmatprep.subr.mxu0 0.0
  %435 = vmatpush2.msra.mxu0 0.0
  %436 = vmatprep.subr.mxu0 0.0
  %437 = vmatpush2.msra.mxu0 0.0
  %438 = vmatprep.subr.mxu0 0.0
  %439 = vmatpush2.msra.mxu0 0.0
  %440 = vmatprep.mubr.f32.mxu0 0.0
  %441 = vmatmul.mubr.f32.gmra.mxu0 %v365
  %v442 = vpop.f32.mrf.mxu0
  %v443 = vadd.f32 0.0, %v442
  %v444 = vpop.f32.mrf.mxu0
  %445 = vmatprep.mubr.f32.mxu0 0.0
  %446 = vmatmul.mubr.f32.gmra.mxu0 %v368
  %v447 = vpop.f32.mrf.mxu0
  %v448 = vadd.f32 0.0, %v447
  %v449 = vpop.f32.mrf.mxu0
  %450 = vmatprep.mubr.f32.mxu0 0.0
  %451 = vmatmul.mubr.f32.gmra.mxu0 %v371
  %v452 = vpop.f32.mrf.mxu0
  %v453 = vadd.f32 0.0, %v452
  %v454 = vpop.f32.mrf.mxu0
  %455 = vmatprep.mubr.f32.mxu0 0.0
  %456 = vmatmul.mubr.f32.gmra.mxu0 %v374
  %v457 = vpop.f32.mrf.mxu0
  %v458 = vadd.f32 0.0, %v457
  %v459 = vpop.f32.mrf.mxu0
  %460 = vdwg.mxu0
  %v461 = vld [vmem:[%s4] sm:$0xff]
  %v462 = vld [vmem:[%s4 + $0x8] sm:$0xff]
  %vm463 = vcmp.ne.s32.totalorder %v461, 0
  %vm464 = vcmp.ne.s32.totalorder %v462, 0
  %v465 = vsel %vm463, 1, 0
  %v466 = vsel %vm464, 1, 0
  %v467 = vcvt.s32.f32 %v465
  %v468 = vcvt.s32.f32 %v466
  %v470 = vsel %vm44, %v358, 0
  %v473 = vsel %vm44, %v359, 0
  %475 = vmatprep.subr.mxu0 0.0
  %476 = vmatpush1.msra.mxu0 0.0
  %477 = vmatprep.subr.mxu0 0.0
  %478 = vmatpush1.msra.mxu0 0.0
  %479 = vmatprep.subr.mxu0 0.0
  %480 = vmatpush1.msra.mxu0 0.0
  %481 = vmatprep.subr.mxu0 0.0
  %482 = vmatpush1.msra.mxu0 0.0
  %483 = vmatprep.subr.mxu0 0.0
  %484 = vmatpush1.msra.mxu0 0.0
  %485 = vmatprep.subr.mxu0 0.0
  %486 = vmatpush1.msra.mxu0 0.0
  %487 = vmatprep.subr.mxu0 0.0
  %488 = vmatpush1.msra.mxu0 0.0
  %489 = vmatprep.subr.mxu0 0.0
  %490 = vmatpush1.msra.mxu0 0.0
  %491 = vmatprep.subr.mxu0 0.0
  %492 = vmatpush1.msra.mxu0 %v319
  %493 = vmatprep.subr.mxu0 0.0
  %494 = vmatpush1.msra.mxu0 %v318
  %495 = vmatprep.subr.mxu0 0.0
  %496 = vmatpush1.msra.mxu0 %v317
  %497 = vmatprep.subr.mxu0 0.0
  %498 = vmatpush1.msra.mxu0 %v316
  %499 = vmatprep.subr.mxu0 0.0
  %500 = vmatpush1.msra.mxu0 %v315
  %501 = vmatprep.subr.mxu0 0.0
  %502 = vmatpush1.msra.mxu0 %v314
  %503 = vmatprep.subr.mxu0 0.0
  %504 = vmatpush1.msra.mxu0 %v313
  %505 = vmatprep.subr.mxu0 0.0
  %506 = vmatpush1.msra.mxu0 %v312
  %507 = vmatprep.subr.mxu0 0.0
  %508 = vmatpush2.msra.mxu0 0.0
  %509 = vmatprep.subr.mxu0 0.0
  %510 = vmatpush2.msra.mxu0 0.0
  %511 = vmatprep.subr.mxu0 0.0
  %512 = vmatpush2.msra.mxu0 0.0
  %513 = vmatprep.subr.mxu0 0.0
  %514 = vmatpush2.msra.mxu0 0.0
  %515 = vmatprep.subr.mxu0 0.0
  %516 = vmatpush2.msra.mxu0 0.0
  %517 = vmatprep.subr.mxu0 0.0
  %518 = vmatpush2.msra.mxu0 0.0
  %519 = vmatprep.subr.mxu0 0.0
  %520 = vmatpush2.msra.mxu0 0.0
  %521 = vmatprep.subr.mxu0 0.0
  %522 = vmatpush2.msra.mxu0 0.0
  %523 = vmatprep.subr.mxu0 0.0
  %524 = vmatpush2.msra.mxu0 0.0
  %525 = vmatprep.subr.mxu0 0.0
  %526 = vmatpush2.msra.mxu0 0.0
  %527 = vmatprep.subr.mxu0 0.0
  %528 = vmatpush2.msra.mxu0 0.0
  %529 = vmatprep.subr.mxu0 0.0
  %530 = vmatpush2.msra.mxu0 0.0
  %531 = vmatprep.subr.mxu0 0.0
  %532 = vmatpush2.msra.mxu0 0.0
  %533 = vmatprep.subr.mxu0 0.0
  %534 = vmatpush2.msra.mxu0 0.0
  %535 = vmatprep.subr.mxu0 0.0
  %536 = vmatpush2.msra.mxu0 0.0
  %537 = vmatprep.subr.mxu0 0.0
  %538 = vmatpush2.msra.mxu0 0.0
  %539 = vmatprep.mubr.f32.mxu0 0.0
  %540 = vmatmul.mubr.f32.gmra.mxu0 %v470
  %v541 = vpop.f32.mrf.mxu0
  %v542 = vadd.f32 %v23, %v541
  %v543 = vpop.f32.mrf.mxu0
  %544 = vmatprep.mubr.f32.mxu0 0.0
  %545 = vmatmul.mubr.f32.gmra.mxu0 %v473
  %v546 = vpop.f32.mrf.mxu0
  %v547 = vadd.f32 %v24, %v546
  %v548 = vpop.f32.mrf.mxu0
  %549 = vdwg.mxu0
  %551 = vset.pattern.permute.xlu0 0
  %552 = vperm.xlu0 %551, %v467
  %v553 = vpop.permute.xlu0 %552
  %556 = vset.pattern.permute.xlu0 0
  %557 = vperm.xlu0 %556, %v468
  %v558 = vpop.permute.xlu0 %557
  %v560 = vmul.f32 %v542, %v553
  %v561 = vmul.f32 %v547, %v558
  %v562 = vld [vmem:[%s5] sm:$0xff]
  %v563 = vld [vmem:[%s5 + $0x8] sm:$0xff]
  %v564 = vsel %vm182, %v560, 0.0
  %565 = vadd.xlane.f32.xlu0 %v564
  %v566 = vpop.xlane.xlu0 %565
  %v567 = vsel %vm182, %v561, 0.0
  %568 = vadd.xlane.f32.xlu0 %v567
  %v569 = vpop.xlane.xlu0 %568
  %v570 = vrcp.pop 32.0
  %v571 = vmul.f32 %v566, %v570
  %v572 = vmul.f32 %v569, %v570
  %v573 = vsub.f32 %v560, %v571
  %v574 = vsub.f32 %v561, %v572
  %v575 = vmul.f32 %v573, %v573
  %v576 = vmul.f32 %v574, %v574
  %v577 = vsel %vm182, %v575, 0.0
  %578 = vadd.xlane.f32.xlu0 %v577
  %v579 = vpop.xlane.xlu0 %578
  %v580 = vsel %vm182, %v576, 0.0
  %581 = vadd.xlane.f32.xlu0 %v580
  %v582 = vpop.xlane.xlu0 %581
  %v583 = vmul.f32 %v579, %v570
  %v584 = vmul.f32 %v582, %v570
  %v585 = vadd.f32 %v583, 1e-08
  %v586 = vadd.f32 %v584, 1e-08
  %v587 = vrsqrt.pop %v585
  %v588 = vrsqrt.pop %v586
  %v589 = vmul.f32 %v573, %v587
  %v590 = vmul.f32 %v574, %v588
  %v591 = vlaneseq
  %v592 = vshrl.u32 %v591, 7
  %v593 = vsub.s32 1, %v592
  %v594 = vrot.slane %v25, %v593
  %v595 = vmul.f32 %v589, %v594
  %v596 = vmul.f32 %v590, %v594
  %v597 = vlaneseq
  %v598 = vshrl.u32 %v597, 7
  %v599 = vsub.s32 2, %v598
  %v600 = vrot.slane %v25, %v599
  %v601 = vadd.f32 %v595, %v600
  %v602 = vadd.f32 %v596, %v600
  %s603 = scalar_lea.vmem %s2, 32
  %v604 = vld [vmem:[%s603] sm:$0xff]
  %v605 = vld [vmem:[%s603 + $0x8] sm:$0xff]
  %v606 = vld [vmem:[%s603 + $0x10] sm:$0xff]
  %v607 = vld [vmem:[%s603 + $0x18] sm:$0xff]
  %v608 = vlaneseq
  %v609 = vshrl.u32 %v608, 7
  %v610 = vsub.s32 3, %v609
  %v611 = vrot.slane %v25, %v610
  %v613 = vsel %vm182, %v601, 0
  %v616 = vsel %vm182, %v602, 0
  %618 = vmatprep.subr.mxu0 0.0
  %619 = vmatpush1.msra.mxu0 0.0
  %620 = vmatprep.subr.mxu0 0.0
  %621 = vmatpush1.msra.mxu0 0.0
  %622 = vmatprep.subr.mxu0 0.0
  %623 = vmatpush1.msra.mxu0 0.0
  %624 = vmatprep.subr.mxu0 0.0
  %625 = vmatpush1.msra.mxu0 0.0
  %626 = vmatprep.subr.mxu0 0.0
  %627 = vmatpush1.msra.mxu0 0.0
  %628 = vmatprep.subr.mxu0 0.0
  %629 = vmatpush1.msra.mxu0 0.0
  %630 = vmatprep.subr.mxu0 0.0
  %631 = vmatpush1.msra.mxu0 0.0
  %632 = vmatprep.subr.mxu0 0.0
  %633 = vmatpush1.msra.mxu0 0.0
  %634 = vmatprep.subr.mxu0 0.0
  %635 = vmatpush1.msra.mxu0 0.0
  %636 = vmatprep.subr.mxu0 0.0
  %637 = vmatpush1.msra.mxu0 0.0
  %638 = vmatprep.subr.mxu0 0.0
  %639 = vmatpush1.msra.mxu0 0.0
  %640 = vmatprep.subr.mxu0 0.0
  %641 = vmatpush1.msra.mxu0 0.0
  %642 = vmatprep.subr.mxu0 0.0
  %643 = vmatpush1.msra.mxu0 %v607
  %644 = vmatprep.subr.mxu0 0.0
  %645 = vmatpush1.msra.mxu0 %v606
  %646 = vmatprep.subr.mxu0 0.0
  %647 = vmatpush1.msra.mxu0 %v605
  %648 = vmatprep.subr.mxu0 0.0
  %649 = vmatpush1.msra.mxu0 %v604
  %650 = vmatprep.subr.mxu0 0.0
  %651 = vmatpush2.msra.mxu0 0.0
  %652 = vmatprep.subr.mxu0 0.0
  %653 = vmatpush2.msra.mxu0 0.0
  %654 = vmatprep.subr.mxu0 0.0
  %655 = vmatpush2.msra.mxu0 0.0
  %656 = vmatprep.subr.mxu0 0.0
  %657 = vmatpush2.msra.mxu0 0.0
  %658 = vmatprep.subr.mxu0 0.0
  %659 = vmatpush2.msra.mxu0 0.0
  %660 = vmatprep.subr.mxu0 0.0
  %661 = vmatpush2.msra.mxu0 0.0
  %662 = vmatprep.subr.mxu0 0.0
  %663 = vmatpush2.msra.mxu0 0.0
  %664 = vmatprep.subr.mxu0 0.0
  %665 = vmatpush2.msra.mxu0 0.0
  %666 = vmatprep.subr.mxu0 0.0
  %667 = vmatpush2.msra.mxu0 0.0
  %668 = vmatprep.subr.mxu0 0.0
  %669 = vmatpush2.msra.mxu0 0.0
  %670 = vmatprep.subr.mxu0 0.0
  %671 = vmatpush2.msra.mxu0 0.0
  %672 = vmatprep.subr.mxu0 0.0
  %673 = vmatpush2.msra.mxu0 0.0
  %674 = vmatprep.subr.mxu0 0.0
  %675 = vmatpush2.msra.mxu0 0.0
  %676 = vmatprep.subr.mxu0 0.0
  %677 = vmatpush2.msra.mxu0 0.0
  %678 = vmatprep.subr.mxu0 0.0
  %679 = vmatpush2.msra.mxu0 0.0
  %680 = vmatprep.subr.mxu0 0.0
  %681 = vmatpush2.msra.mxu0 0.0
  %682 = vmatprep.mubr.f32.mxu0 0.0
  %683 = vmatmul.mubr.f32.gmra.mxu0 %v613
  %v684 = vpop.f32.mrf.mxu0
  %v685 = vadd.f32 %v611, %v684
  %v686 = vpop.f32.mrf.mxu0
  %687 = vmatprep.mubr.f32.mxu0 0.0
  %688 = vmatmul.mubr.f32.gmra.mxu0 %v616
  %v689 = vpop.f32.mrf.mxu0
  %v690 = vadd.f32 %v611, %v689
  %v691 = vpop.f32.mrf.mxu0
  %692 = vdwg.mxu0
  %s693 = scalar_lea.vmem %s2, 64
  %v694 = vld [vmem:[%s693] sm:$0xff]
  %v695 = vld [vmem:[%s693 + $0x8] sm:$0xff]
  %v696 = vld [vmem:[%s693 + $0x10] sm:$0xff]
  %v697 = vld [vmem:[%s693 + $0x18] sm:$0xff]
  %v698 = vlaneseq
  %v699 = vshrl.u32 %v698, 7
  %v700 = vsub.s32 4, %v699
  %v701 = vrot.slane %v25, %v700
  %v703 = vsel %vm182, %v560, 0
  %v706 = vsel %vm182, %v561, 0
  %708 = vmatprep.subr.mxu0 0.0
  %709 = vmatpush1.msra.mxu0 0.0
  %710 = vmatprep.subr.mxu0 0.0
  %711 = vmatpush1.msra.mxu0 0.0
  %712 = vmatprep.subr.mxu0 0.0
  %713 = vmatpush1.msra.mxu0 0.0
  %714 = vmatprep.subr.mxu0 0.0
  %715 = vmatpush1.msra.mxu0 0.0
  %716 = vmatprep.subr.mxu0 0.0
  %717 = vmatpush1.msra.mxu0 0.0
  %718 = vmatprep.subr.mxu0 0.0
  %719 = vmatpush1.msra.mxu0 0.0
  %720 = vmatprep.subr.mxu0 0.0
  %721 = vmatpush1.msra.mxu0 0.0
  %722 = vmatprep.subr.mxu0 0.0
  %723 = vmatpush1.msra.mxu0 0.0
  %724 = vmatprep.subr.mxu0 0.0
  %725 = vmatpush1.msra.mxu0 0.0
  %726 = vmatprep.subr.mxu0 0.0
  %727 = vmatpush1.msra.mxu0 0.0
  %728 = vmatprep.subr.mxu0 0.0
  %729 = vmatpush1.msra.mxu0 0.0
  %730 = vmatprep.subr.mxu0 0.0
  %731 = vmatpush1.msra.mxu0 0.0
  %732 = vmatprep.subr.mxu0 0.0
  %733 = vmatpush1.msra.mxu0 %v697
  %734 = vmatprep.subr.mxu0 0.0
  %735 = vmatpush1.msra.mxu0 %v696
  %736 = vmatprep.subr.mxu0 0.0
  %737 = vmatpush1.msra.mxu0 %v695
  %738 = vmatprep.subr.mxu0 0.0
  %739 = vmatpush1.msra.mxu0 %v694
  %740 = vmatprep.subr.mxu0 0.0
  %741 = vmatpush2.msra.mxu0 0.0
  %742 = vmatprep.subr.mxu0 0.0
  %743 = vmatpush2.msra.mxu0 0.0
  %744 = vmatprep.subr.mxu0 0.0
  %745 = vmatpush2.msra.mxu0 0.0
  %746 = vmatprep.subr.mxu0 0.0
  %747 = vmatpush2.msra.mxu0 0.0
  %748 = vmatprep.subr.mxu0 0.0
  %749 = vmatpush2.msra.mxu0 0.0
  %750 = vmatprep.subr.mxu0 0.0
  %751 = vmatpush2.msra.mxu0 0.0
  %752 = vmatprep.subr.mxu0 0.0
  %753 = vmatpush2.msra.mxu0 0.0
  %754 = vmatprep.subr.mxu0 0.0
  %755 = vmatpush2.msra.mxu0 0.0
  %756 = vmatprep.subr.mxu0 0.0
  %757 = vmatpush2.msra.mxu0 0.0
  %758 = vmatprep.subr.mxu0 0.0
  %759 = vmatpush2.msra.mxu0 0.0
  %760 = vmatprep.subr.mxu0 0.0
  %761 = vmatpush2.msra.mxu0 0.0
  %762 = vmatprep.subr.mxu0 0.0
  %763 = vmatpush2.msra.mxu0 0.0
  %764 = vmatprep.subr.mxu0 0.0
  %765 = vmatpush2.msra.mxu0 0.0
  %766 = vmatprep.subr.mxu0 0.0
  %767 = vmatpush2.msra.mxu0 0.0
  %768 = vmatprep.subr.mxu0 0.0
  %769 = vmatpush2.msra.mxu0 0.0
  %770 = vmatprep.subr.mxu0 0.0
  %771 = vmatpush2.msra.mxu0 0.0
  %772 = vmatprep.mubr.f32.mxu0 0.0
  %773 = vmatmul.mubr.f32.gmra.mxu0 %v703
  %v774 = vpop.f32.mrf.mxu0
  %v775 = vadd.f32 %v701, %v774
  %v776 = vpop.f32.mrf.mxu0
  %777 = vmatprep.mubr.f32.mxu0 0.0
  %778 = vmatmul.mubr.f32.gmra.mxu0 %v706
  %v779 = vpop.f32.mrf.mxu0
  %v780 = vadd.f32 %v701, %v779
  %v781 = vpop.f32.mrf.mxu0
  %782 = vdwg.mxu0
  %s783 = scalar_lea.vmem %s2, 96
  %v784 = vld [vmem:[%s783] sm:$0xff]
  %v785 = vld [vmem:[%s783 + $0x8] sm:$0xff]
  %v786 = vld [vmem:[%s783 + $0x10] sm:$0xff]
  %v787 = vld [vmem:[%s783 + $0x18] sm:$0xff]
  %v788 = vlaneseq
  %v789 = vshrl.u32 %v788, 7
  %v790 = vsub.s32 5, %v789
  %v791 = vrot.slane %v25, %v790
  %792 = vmatprep.subr.mxu0 0.0
  %793 = vmatpush1.msra.mxu0 0.0
  %794 = vmatprep.subr.mxu0 0.0
  %795 = vmatpush1.msra.mxu0 0.0
  %796 = vmatprep.subr.mxu0 0.0
  %797 = vmatpush1.msra.mxu0 0.0
  %798 = vmatprep.subr.mxu0 0.0
  %799 = vmatpush1.msra.mxu0 0.0
  %800 = vmatprep.subr.mxu0 0.0
  %801 = vmatpush1.msra.mxu0 0.0
  %802 = vmatprep.subr.mxu0 0.0
  %803 = vmatpush1.msra.mxu0 0.0
  %804 = vmatprep.subr.mxu0 0.0
  %805 = vmatpush1.msra.mxu0 0.0
  %806 = vmatprep.subr.mxu0 0.0
  %807 = vmatpush1.msra.mxu0 0.0
  %808 = vmatprep.subr.mxu0 0.0
  %809 = vmatpush1.msra.mxu0 0.0
  %810 = vmatprep.subr.mxu0 0.0
  %811 = vmatpush1.msra.mxu0 0.0
  %812 = vmatprep.subr.mxu0 0.0
  %813 = vmatpush1.msra.mxu0 0.0
  %814 = vmatprep.subr.mxu0 0.0
  %815 = vmatpush1.msra.mxu0 0.0
  %816 = vmatprep.subr.mxu0 0.0
  %817 = vmatpush1.msra.mxu0 %v787
  %818 = vmatprep.subr.mxu0 0.0
  %819 = vmatpush1.msra.mxu0 %v786
  %820 = vmatprep.subr.mxu0 0.0
  %821 = vmatpush1.msra.mxu0 %v785
  %822 = vmatprep.subr.mxu0 0.0
  %823 = vmatpush1.msra.mxu0 %v784
  %824 = vmatprep.subr.mxu0 0.0
  %825 = vmatpush2.msra.mxu0 0.0
  %826 = vmatprep.subr.mxu0 0.0
  %827 = vmatpush2.msra.mxu0 0.0
  %828 = vmatprep.subr.mxu0 0.0
  %829 = vmatpush2.msra.mxu0 0.0
  %830 = vmatprep.subr.mxu0 0.0
  %831 = vmatpush2.msra.mxu0 0.0
  %832 = vmatprep.subr.mxu0 0.0
  %833 = vmatpush2.msra.mxu0 0.0
  %834 = vmatprep.subr.mxu0 0.0
  %835 = vmatpush2.msra.mxu0 0.0
  %836 = vmatprep.subr.mxu0 0.0
  %837 = vmatpush2.msra.mxu0 0.0
  %838 = vmatprep.subr.mxu0 0.0
  %839 = vmatpush2.msra.mxu0 0.0
  %840 = vmatprep.subr.mxu0 0.0
  %841 = vmatpush2.msra.mxu0 0.0
  %842 = vmatprep.subr.mxu0 0.0
  %843 = vmatpush2.msra.mxu0 0.0
  %844 = vmatprep.subr.mxu0 0.0
  %845 = vmatpush2.msra.mxu0 0.0
  %846 = vmatprep.subr.mxu0 0.0
  %847 = vmatpush2.msra.mxu0 0.0
  %848 = vmatprep.subr.mxu0 0.0
  %849 = vmatpush2.msra.mxu0 0.0
  %850 = vmatprep.subr.mxu0 0.0
  %851 = vmatpush2.msra.mxu0 0.0
  %852 = vmatprep.subr.mxu0 0.0
  %853 = vmatpush2.msra.mxu0 0.0
  %854 = vmatprep.subr.mxu0 0.0
  %855 = vmatpush2.msra.mxu0 0.0
  %856 = vmatprep.mubr.f32.mxu0 0.0
  %857 = vmatmul.mubr.f32.gmra.mxu0 %v703
  %v858 = vpop.f32.mrf.mxu0
  %v859 = vadd.f32 %v791, %v858
  %v860 = vpop.f32.mrf.mxu0
  %861 = vmatprep.mubr.f32.mxu0 0.0
  %862 = vmatmul.mubr.f32.gmra.mxu0 %v706
  %v863 = vpop.f32.mrf.mxu0
  %v864 = vadd.f32 %v791, %v863
  %v865 = vpop.f32.mrf.mxu0
  %866 = vdwg.mxu0
  %v868 = vsel %vm182, %v685, 0
  %v871 = vsel %vm182, %v690, 0
  %v874 = vsel %vm182, %v775, 0
  %v877 = vsel %vm182, %v780, 0
  %879 = vmatprep.subr.mxu0 0.0
  %880 = vmatpush1.xpose.msra.mxu0 0.0
  %881 = vmatprep.subr.mxu0 0.0
  %882 = vmatpush1.xpose.msra.mxu0 0.0
  %883 = vmatprep.subr.mxu0 0.0
  %884 = vmatpush1.xpose.msra.mxu0 0.0
  %885 = vmatprep.subr.mxu0 0.0
  %886 = vmatpush1.xpose.msra.mxu0 0.0
  %887 = vmatprep.subr.mxu0 0.0
  %888 = vmatpush1.xpose.msra.mxu0 0.0
  %889 = vmatprep.subr.mxu0 0.0
  %890 = vmatpush1.xpose.msra.mxu0 0.0
  %891 = vmatprep.subr.mxu0 0.0
  %892 = vmatpush1.xpose.msra.mxu0 0.0
  %893 = vmatprep.subr.mxu0 0.0
  %894 = vmatpush1.xpose.msra.mxu0 0.0
  %895 = vmatprep.subr.mxu0 0.0
  %896 = vmatpush1.xpose.msra.mxu0 0.0
  %897 = vmatprep.subr.mxu0 0.0
  %898 = vmatpush1.xpose.msra.mxu0 0.0
  %899 = vmatprep.subr.mxu0 0.0
  %900 = vmatpush1.xpose.msra.mxu0 0.0
  %901 = vmatprep.subr.mxu0 0.0
  %902 = vmatpush1.xpose.msra.mxu0 0.0
  %903 = vmatprep.subr.mxu0 0.0
  %904 = vmatpush1.xpose.msra.mxu0 0.0
  %905 = vmatprep.subr.mxu0 0.0
  %906 = vmatpush1.xpose.msra.mxu0 0.0
  %907 = vmatprep.subr.mxu0 0.0
  %908 = vmatpush1.xpose.msra.mxu0 %v877
  %909 = vmatprep.subr.mxu0 0.0
  %910 = vmatpush1.xpose.msra.mxu0 %v874
  %911 = vmatprep.subr.mxu0 0.0
  %912 = vmatpush2.xpose.msra.mxu0 0.0
  %913 = vmatprep.subr.mxu0 0.0
  %914 = vmatpush2.xpose.msra.mxu0 0.0
  %915 = vmatprep.subr.mxu0 0.0
  %916 = vmatpush2.xpose.msra.mxu0 0.0
  %917 = vmatprep.subr.mxu0 0.0
  %918 = vmatpush2.xpose.msra.mxu0 0.0
  %919 = vmatprep.subr.mxu0 0.0
  %920 = vmatpush2.xpose.msra.mxu0 0.0
  %921 = vmatprep.subr.mxu0 0.0
  %922 = vmatpush2.xpose.msra.mxu0 0.0
  %923 = vmatprep.subr.mxu0 0.0
  %924 = vmatpush2.xpose.msra.mxu0 0.0
  %925 = vmatprep.subr.mxu0 0.0
  %926 = vmatpush2.xpose.msra.mxu0 0.0
  %927 = vmatprep.subr.mxu0 0.0
  %928 = vmatpush2.xpose.msra.mxu0 0.0
  %929 = vmatprep.subr.mxu0 0.0
  %930 = vmatpush2.xpose.msra.mxu0 0.0
  %931 = vmatprep.subr.mxu0 0.0
  %932 = vmatpush2.xpose.msra.mxu0 0.0
  %933 = vmatprep.subr.mxu0 0.0
  %934 = vmatpush2.xpose.msra.mxu0 0.0
  %935 = vmatprep.subr.mxu0 0.0
  %936 = vmatpush2.xpose.msra.mxu0 0.0
  %937 = vmatprep.subr.mxu0 0.0
  %938 = vmatpush2.xpose.msra.mxu0 0.0
  %939 = vmatprep.subr.mxu0 0.0
  %940 = vmatpush2.xpose.msra.mxu0 0.0
  %941 = vmatprep.subr.mxu0 0.0
  %942 = vmatpush2.xpose.msra.mxu0 0.0
  %943 = vmatprep.mubr.f32.mxu0 0.0
  %944 = vmatmul.mubr.f32.gmra.mxu0 %v868
  %v945 = vpop.f32.mrf.mxu0
  %v946 = vadd.f32 %v562, %v945
  %v947 = vpop.f32.mrf.mxu0
  %948 = vmatprep.mubr.f32.mxu0 0.0
  %949 = vmatmul.mubr.f32.gmra.mxu0 %v871
  %v950 = vpop.f32.mrf.mxu0
  %v951 = vadd.f32 %v563, %v950
  %v952 = vpop.f32.mrf.mxu0
  %953 = vdwg.mxu0
  %vm954 = vcmask 130048
  %v955 = vsel %vm954, %v946, -inf
  %956 = vmax.xlane.f32.xlu0 %v955
  %v957 = vpop.xlane.xlu0 %956
  %v958 = vsel %vm954, %v951, -inf
  %959 = vmax.xlane.f32.xlu0 %v958
  %v960 = vpop.xlane.xlu0 %959
  %v961 = vsub.f32 %v946, %v957
  %v962 = vsub.f32 %v951, %v960
  %v963 = vmul.f32 %v961, 1.442695
  %v964 = vpow.pop %v963
  %v965 = vmul.f32 %v962, 1.442695
  %v966 = vpow.pop %v965
  %v967 = vsel %vm954, %v964, 0.0
  %968 = vadd.xlane.f32.xlu0 %v967
  %v969 = vpop.xlane.xlu0 %968
  %v970 = vsel %vm954, %v966, 0.0
  %971 = vadd.xlane.f32.xlu0 %v970
  %v972 = vpop.xlane.xlu0 %971
  %v973 = vrcp.pop %v969
  %v974 = vrcp.pop %v972
  %v975 = vmul.f32 %v964, %v973
  %v976 = vmul.f32 %v966, %v974
  %v978 = vsel %vm954, %v975, 0
  %v981 = vsel %vm954, %v976, 0
  %983 = vmatprep.subr.mxu0 0.0
  %984 = vmatpush1.msra.mxu0 0.0
  %985 = vmatprep.subr.mxu0 0.0
  %986 = vmatpush1.msra.mxu0 0.0
  %987 = vmatprep.subr.mxu0 0.0
  %988 = vmatpush1.msra.mxu0 0.0
  %989 = vmatprep.subr.mxu0 0.0
  %990 = vmatpush1.msra.mxu0 0.0
  %991 = vmatprep.subr.mxu0 0.0
  %992 = vmatpush1.msra.mxu0 0.0
  %993 = vmatprep.subr.mxu0 0.0
  %994 = vmatpush1.msra.mxu0 0.0
  %995 = vmatprep.subr.mxu0 0.0
  %996 = vmatpush1.msra.mxu0 0.0
  %997 = vmatprep.subr.mxu0 0.0
  %998 = vmatpush1.msra.mxu0 0.0
  %999 = vmatprep.subr.mxu0 0.0
  %1000 = vmatpush1.msra.mxu0 0.0
  %1001 = vmatprep.subr.mxu0 0.0
  %1002 = vmatpush1.msra.mxu0 0.0
  %1003 = vmatprep.subr.mxu0 0.0
  %1004 = vmatpush1.msra.mxu0 0.0
  %1005 = vmatprep.subr.mxu0 0.0
  %1006 = vmatpush1.msra.mxu0 0.0
  %1007 = vmatprep.subr.mxu0 0.0
  %1008 = vmatpush1.msra.mxu0 0.0
  %1009 = vmatprep.subr.mxu0 0.0
  %1010 = vmatpush1.msra.mxu0 0.0
  %1011 = vmatprep.subr.mxu0 0.0
  %1012 = vmatpush1.msra.mxu0 %v864
  %1013 = vmatprep.subr.mxu0 0.0
  %1014 = vmatpush1.msra.mxu0 %v859
  %1015 = vmatprep.subr.mxu0 0.0
  %1016 = vmatpush2.msra.mxu0 0.0
  %1017 = vmatprep.subr.mxu0 0.0
  %1018 = vmatpush2.msra.mxu0 0.0
  %1019 = vmatprep.subr.mxu0 0.0
  %1020 = vmatpush2.msra.mxu0 0.0
  %1021 = vmatprep.subr.mxu0 0.0
  %1022 = vmatpush2.msra.mxu0 0.0
  %1023 = vmatprep.subr.mxu0 0.0
  %1024 = vmatpush2.msra.mxu0 0.0
  %1025 = vmatprep.subr.mxu0 0.0
  %1026 = vmatpush2.msra.mxu0 0.0
  %1027 = vmatprep.subr.mxu0 0.0
  %1028 = vmatpush2.msra.mxu0 0.0
  %1029 = vmatprep.subr.mxu0 0.0
  %1030 = vmatpush2.msra.mxu0 0.0
  %1031 = vmatprep.subr.mxu0 0.0
  %1032 = vmatpush2.msra.mxu0 0.0
  %1033 = vmatprep.subr.mxu0 0.0
  %1034 = vmatpush2.msra.mxu0 0.0
  %1035 = vmatprep.subr.mxu0 0.0
  %1036 = vmatpush2.msra.mxu0 0.0
  %1037 = vmatprep.subr.mxu0 0.0
  %1038 = vmatpush2.msra.mxu0 0.0
  %1039 = vmatprep.subr.mxu0 0.0
  %1040 = vmatpush2.msra.mxu0 0.0
  %1041 = vmatprep.subr.mxu0 0.0
  %1042 = vmatpush2.msra.mxu0 0.0
  %1043 = vmatprep.subr.mxu0 0.0
  %1044 = vmatpush2.msra.mxu0 0.0
  %1045 = vmatprep.subr.mxu0 0.0
  %1046 = vmatpush2.msra.mxu0 0.0
  %1047 = vmatprep.mubr.f32.mxu0 0.0
  %1048 = vmatmul.mubr.f32.gmra.mxu0 %v978
  %v1049 = vpop.f32.mrf.mxu0
  %v1050 = vadd.f32 0.0, %v1049
  %v1051 = vpop.f32.mrf.mxu0
  %1052 = vmatprep.mubr.f32.mxu0 0.0
  %1053 = vmatmul.mubr.f32.gmra.mxu0 %v981
  %v1054 = vpop.f32.mrf.mxu0
  %v1055 = vadd.f32 0.0, %v1054
  %v1056 = vpop.f32.mrf.mxu0
  %1057 = vdwg.mxu0
  %s1058 = scalar_lea.vmem %s2, 128
  %v1059 = vld [vmem:[%s1058] sm:$0xff]
  %v1060 = vld [vmem:[%s1058 + $0x8] sm:$0xff]
  %v1061 = vld [vmem:[%s1058 + $0x10] sm:$0xff]
  %v1062 = vld [vmem:[%s1058 + $0x18] sm:$0xff]
  %v1063 = vlaneseq
  %v1064 = vshrl.u32 %v1063, 7
  %v1065 = vsub.s32 6, %v1064
  %v1066 = vrot.slane %v25, %v1065
  %v1068 = vsel %vm182, %v1050, 0
  %v1071 = vsel %vm182, %v1055, 0
  %1073 = vmatprep.subr.mxu0 0.0
  %1074 = vmatpush1.msra.mxu0 0.0
  %1075 = vmatprep.subr.mxu0 0.0
  %1076 = vmatpush1.msra.mxu0 0.0
  %1077 = vmatprep.subr.mxu0 0.0
  %1078 = vmatpush1.msra.mxu0 0.0
  %1079 = vmatprep.subr.mxu0 0.0
  %1080 = vmatpush1.msra.mxu0 0.0
  %1081 = vmatprep.subr.mxu0 0.0
  %1082 = vmatpush1.msra.mxu0 0.0
  %1083 = vmatprep.subr.mxu0 0.0
  %1084 = vmatpush1.msra.mxu0 0.0
  %1085 = vmatprep.subr.mxu0 0.0
  %1086 = vmatpush1.msra.mxu0 0.0
  %1087 = vmatprep.subr.mxu0 0.0
  %1088 = vmatpush1.msra.mxu0 0.0
  %1089 = vmatprep.subr.mxu0 0.0
  %1090 = vmatpush1.msra.mxu0 0.0
  %1091 = vmatprep.subr.mxu0 0.0
  %1092 = vmatpush1.msra.mxu0 0.0
  %1093 = vmatprep.subr.mxu0 0.0
  %1094 = vmatpush1.msra.mxu0 0.0
  %1095 = vmatprep.subr.mxu0 0.0
  %1096 = vmatpush1.msra.mxu0 0.0
  %1097 = vmatprep.subr.mxu0 0.0
  %1098 = vmatpush1.msra.mxu0 %v1062
  %1099 = vmatprep.subr.mxu0 0.0
  %1100 = vmatpush1.msra.mxu0 %v1061
  %1101 = vmatprep.subr.mxu0 0.0
  %1102 = vmatpush1.msra.mxu0 %v1060
  %1103 = vmatprep.subr.mxu0 0.0
  %1104 = vmatpush1.msra.mxu0 %v1059
  %1105 = vmatprep.subr.mxu0 0.0
  %1106 = vmatpush2.msra.mxu0 0.0
  %1107 = vmatprep.subr.mxu0 0.0
  %1108 = vmatpush2.msra.mxu0 0.0
  %1109 = vmatprep.subr.mxu0 0.0
  %1110 = vmatpush2.msra.mxu0 0.0
  %1111 = vmatprep.subr.mxu0 0.0
  %1112 = vmatpush2.msra.mxu0 0.0
  %1113 = vmatprep.subr.mxu0 0.0
  %1114 = vmatpush2.msra.mxu0 0.0
  %1115 = vmatprep.subr.mxu0 0.0
  %1116 = vmatpush2.msra.mxu0 0.0
  %1117 = vmatprep.subr.mxu0 0.0
  %1118 = vmatpush2.msra.mxu0 0.0
  %1119 = vmatprep.subr.mxu0 0.0
  %1120 = vmatpush2.msra.mxu0 0.0
  %1121 = vmatprep.subr.mxu0 0.0
  %1122 = vmatpush2.msra.mxu0 0.0
  %1123 = vmatprep.subr.mxu0 0.0
  %1124 = vmatpush2.msra.mxu0 0.0
  %1125 = vmatprep.subr.mxu0 0.0
  %1126 = vmatpush2.msra.mxu0 0.0
  %1127 = vmatprep.subr.mxu0 0.0
  %1128 = vmatpush2.msra.mxu0 0.0
  %1129 = vmatprep.subr.mxu0 0.0
  %1130 = vmatpush2.msra.mxu0 0.0
  %1131 = vmatprep.subr.mxu0 0.0
  %1132 = vmatpush2.msra.mxu0 0.0
  %1133 = vmatprep.subr.mxu0 0.0
  %1134 = vmatpush2.msra.mxu0 0.0
  %1135 = vmatprep.subr.mxu0 0.0
  %1136 = vmatpush2.msra.mxu0 0.0
  %1137 = vmatprep.mubr.f32.mxu0 0.0
  %1138 = vmatmul.mubr.f32.gmra.mxu0 %v1068
  %v1139 = vpop.f32.mrf.mxu0
  %v1140 = vadd.f32 %v1066, %v1139
  %v1141 = vpop.f32.mrf.mxu0
  %1142 = vmatprep.mubr.f32.mxu0 0.0
  %1143 = vmatmul.mubr.f32.gmra.mxu0 %v1071
  %v1144 = vpop.f32.mrf.mxu0
  %v1145 = vadd.f32 %v1066, %v1144
  %v1146 = vpop.f32.mrf.mxu0
  %1147 = vdwg.mxu0
  %v1148 = vadd.f32 %v601, %v1140
  %v1149 = vadd.f32 %v602, %v1145
  %v1150 = vsel %vm182, %v1148, 0.0
  %1151 = vadd.xlane.f32.xlu0 %v1150
  %v1152 = vpop.xlane.xlu0 %1151
  %v1153 = vsel %vm182, %v1149, 0.0
  %1154 = vadd.xlane.f32.xlu0 %v1153
  %v1155 = vpop.xlane.xlu0 %1154
  %v1156 = vmul.f32 %v1152, %v570
  %v1157 = vmul.f32 %v1155, %v570
  %v1158 = vsub.f32 %v1148, %v1156
  %v1159 = vsub.f32 %v1149, %v1157
  %v1160 = vmul.f32 %v1158, %v1158
  %v1161 = vmul.f32 %v1159, %v1159
  %v1162 = vsel %vm182, %v1160, 0.0
  %1163 = vadd.xlane.f32.xlu0 %v1162
  %v1164 = vpop.xlane.xlu0 %1163
  %v1165 = vsel %vm182, %v1161, 0.0
  %1166 = vadd.xlane.f32.xlu0 %v1165
  %v1167 = vpop.xlane.xlu0 %1166
  %v1168 = vmul.f32 %v1164, %v570
  %v1169 = vmul.f32 %v1167, %v570
  %v1170 = vadd.f32 %v1168, 1e-08
  %v1171 = vadd.f32 %v1169, 1e-08
  %v1172 = vrsqrt.pop %v1170
  %v1173 = vrsqrt.pop %v1171
  %v1174 = vmul.f32 %v1158, %v1172
  %v1175 = vmul.f32 %v1159, %v1173
  %v1176 = vlaneseq
  %v1177 = vshrl.u32 %v1176, 7
  %v1178 = vsub.s32 7, %v1177
  %v1179 = vrot.slane %v25, %v1178
  %v1180 = vmul.f32 %v1174, %v1179
  %v1181 = vmul.f32 %v1175, %v1179
  %v1182 = vlaneseq
  %v1183 = vshrl.u32 %v1182, 7
  %v1184 = vsub.s32 0, %v1183
  %v1185 = vrot.slane %v26, %v1184
  %v1186 = vadd.f32 %v1180, %v1185
  %v1187 = vadd.f32 %v1181, %v1185
  %s1188 = scalar_lea.vmem %s2, 160
  %v1189 = vld [vmem:[%s1188] sm:$0xff]
  %v1190 = vld [vmem:[%s1188 + $0x8] sm:$0xff]
  %v1191 = vld [vmem:[%s1188 + $0x10] sm:$0xff]
  %v1192 = vld [vmem:[%s1188 + $0x18] sm:$0xff]
  %v1193 = vlaneseq
  %v1194 = vshrl.u32 %v1193, 7
  %v1195 = vsub.s32 1, %v1194
  %v1196 = vrot.slane %v26, %v1195
  %v1198 = vsel %vm182, %v1186, 0
  %v1201 = vsel %vm182, %v1187, 0
  %1203 = vmatprep.subr.mxu0 0.0
  %1204 = vmatpush1.msra.mxu0 0.0
  %1205 = vmatprep.subr.mxu0 0.0
  %1206 = vmatpush1.msra.mxu0 0.0
  %1207 = vmatprep.subr.mxu0 0.0
  %1208 = vmatpush1.msra.mxu0 0.0
  %1209 = vmatprep.subr.mxu0 0.0
  %1210 = vmatpush1.msra.mxu0 0.0
  %1211 = vmatprep.subr.mxu0 0.0
  %1212 = vmatpush1.msra.mxu0 0.0
  %1213 = vmatprep.subr.mxu0 0.0
  %1214 = vmatpush1.msra.mxu0 0.0
  %1215 = vmatprep.subr.mxu0 0.0
  %1216 = vmatpush1.msra.mxu0 0.0
  %1217 = vmatprep.subr.mxu0 0.0
  %1218 = vmatpush1.msra.mxu0 0.0
  %1219 = vmatprep.subr.mxu0 0.0
  %1220 = vmatpush1.msra.mxu0 0.0
  %1221 = vmatprep.subr.mxu0 0.0
  %1222 = vmatpush1.msra.mxu0 0.0
  %1223 = vmatprep.subr.mxu0 0.0
  %1224 = vmatpush1.msra.mxu0 0.0
  %1225 = vmatprep.subr.mxu0 0.0
  %1226 = vmatpush1.msra.mxu0 0.0
  %1227 = vmatprep.subr.mxu0 0.0
  %1228 = vmatpush1.msra.mxu0 %v1192
  %1229 = vmatprep.subr.mxu0 0.0
  %1230 = vmatpush1.msra.mxu0 %v1191
  %1231 = vmatprep.subr.mxu0 0.0
  %1232 = vmatpush1.msra.mxu0 %v1190
  %1233 = vmatprep.subr.mxu0 0.0
  %1234 = vmatpush1.msra.mxu0 %v1189
  %1235 = vmatprep.subr.mxu0 0.0
  %1236 = vmatpush2.msra.mxu0 0.0
  %1237 = vmatprep.subr.mxu0 0.0
  %1238 = vmatpush2.msra.mxu0 0.0
  %1239 = vmatprep.subr.mxu0 0.0
  %1240 = vmatpush2.msra.mxu0 0.0
  %1241 = vmatprep.subr.mxu0 0.0
  %1242 = vmatpush2.msra.mxu0 0.0
  %1243 = vmatprep.subr.mxu0 0.0
  %1244 = vmatpush2.msra.mxu0 0.0
  %1245 = vmatprep.subr.mxu0 0.0
  %1246 = vmatpush2.msra.mxu0 0.0
  %1247 = vmatprep.subr.mxu0 0.0
  %1248 = vmatpush2.msra.mxu0 0.0
  %1249 = vmatprep.subr.mxu0 0.0
  %1250 = vmatpush2.msra.mxu0 0.0
  %1251 = vmatprep.subr.mxu0 0.0
  %1252 = vmatpush2.msra.mxu0 0.0
  %1253 = vmatprep.subr.mxu0 0.0
  %1254 = vmatpush2.msra.mxu0 0.0
  %1255 = vmatprep.subr.mxu0 0.0
  %1256 = vmatpush2.msra.mxu0 0.0
  %1257 = vmatprep.subr.mxu0 0.0
  %1258 = vmatpush2.msra.mxu0 0.0
  %1259 = vmatprep.subr.mxu0 0.0
  %1260 = vmatpush2.msra.mxu0 0.0
  %1261 = vmatprep.subr.mxu0 0.0
  %1262 = vmatpush2.msra.mxu0 0.0
  %1263 = vmatprep.subr.mxu0 0.0
  %1264 = vmatpush2.msra.mxu0 0.0
  %1265 = vmatprep.subr.mxu0 0.0
  %1266 = vmatpush2.msra.mxu0 0.0
  %1267 = vmatprep.mubr.f32.mxu0 0.0
  %1268 = vmatmul.mubr.f32.gmra.mxu0 %v1198
  %v1269 = vpop.f32.mrf.mxu0
  %v1270 = vadd.f32 %v1196, %v1269
  %v1271 = vpop.f32.mrf.mxu0
  %1272 = vmatprep.mubr.f32.mxu0 0.0
  %1273 = vmatmul.mubr.f32.gmra.mxu0 %v1201
  %v1274 = vpop.f32.mrf.mxu0
  %v1275 = vadd.f32 %v1196, %v1274
  %v1276 = vpop.f32.mrf.mxu0
  %1277 = vdwg.mxu0
  %v1278 = vmax.f32 %v1270, 0.0
  %v1279 = vmax.f32 %v1275, 0.0
  %s1280 = scalar_lea.vmem %s2, 192
  %v1281 = vld [vmem:[%s1280] sm:$0xff]
  %v1282 = vld [vmem:[%s1280 + $0x8] sm:$0xff]
  %v1283 = vld [vmem:[%s1280 + $0x10] sm:$0xff]
  %v1284 = vld [vmem:[%s1280 + $0x18] sm:$0xff]
  %v1285 = vlaneseq
  %v1286 = vshrl.u32 %v1285, 7
  %v1287 = vsub.s32 2, %v1286
  %v1288 = vrot.slane %v26, %v1287
  %v1290 = vsel %vm182, %v1278, 0
  %v1293 = vsel %vm182, %v1279, 0
  %1295 = vmatprep.subr.mxu0 0.0
  %1296 = vmatpush1.msra.mxu0 0.0
  %1297 = vmatprep.subr.mxu0 0.0
  %1298 = vmatpush1.msra.mxu0 0.0
  %1299 = vmatprep.subr.mxu0 0.0
  %1300 = vmatpush1.msra.mxu0 0.0
  %1301 = vmatprep.subr.mxu0 0.0
  %1302 = vmatpush1.msra.mxu0 0.0
  %1303 = vmatprep.subr.mxu0 0.0
  %1304 = vmatpush1.msra.mxu0 0.0
  %1305 = vmatprep.subr.mxu0 0.0
  %1306 = vmatpush1.msra.mxu0 0.0
  %1307 = vmatprep.subr.mxu0 0.0
  %1308 = vmatpush1.msra.mxu0 0.0
  %1309 = vmatprep.subr.mxu0 0.0
  %1310 = vmatpush1.msra.mxu0 0.0
  %1311 = vmatprep.subr.mxu0 0.0
  %1312 = vmatpush1.msra.mxu0 0.0
  %1313 = vmatprep.subr.mxu0 0.0
  %1314 = vmatpush1.msra.mxu0 0.0
  %1315 = vmatprep.subr.mxu0 0.0
  %1316 = vmatpush1.msra.mxu0 0.0
  %1317 = vmatprep.subr.mxu0 0.0
  %1318 = vmatpush1.msra.mxu0 0.0
  %1319 = vmatprep.subr.mxu0 0.0
  %1320 = vmatpush1.msra.mxu0 %v1284
  %1321 = vmatprep.subr.mxu0 0.0
  %1322 = vmatpush1.msra.mxu0 %v1283
  %1323 = vmatprep.subr.mxu0 0.0
  %1324 = vmatpush1.msra.mxu0 %v1282
  %1325 = vmatprep.subr.mxu0 0.0
  %1326 = vmatpush1.msra.mxu0 %v1281
  %1327 = vmatprep.subr.mxu0 0.0
  %1328 = vmatpush2.msra.mxu0 0.0
  %1329 = vmatprep.subr.mxu0 0.0
  %1330 = vmatpush2.msra.mxu0 0.0
  %1331 = vmatprep.subr.mxu0 0.0
  %1332 = vmatpush2.msra.mxu0 0.0
  %1333 = vmatprep.subr.mxu0 0.0
  %1334 = vmatpush2.msra.mxu0 0.0
  %1335 = vmatprep.subr.mxu0 0.0
  %1336 = vmatpush2.msra.mxu0 0.0
  %1337 = vmatprep.subr.mxu0 0.0
  %1338 = vmatpush2.msra.mxu0 0.0
  %1339 = vmatprep.subr.mxu0 0.0
  %1340 = vmatpush2.msra.mxu0 0.0
  %1341 = vmatprep.subr.mxu0 0.0
  %1342 = vmatpush2.msra.mxu0 0.0
  %1343 = vmatprep.subr.mxu0 0.0
  %1344 = vmatpush2.msra.mxu0 0.0
  %1345 = vmatprep.subr.mxu0 0.0
  %1346 = vmatpush2.msra.mxu0 0.0
  %1347 = vmatprep.subr.mxu0 0.0
  %1348 = vmatpush2.msra.mxu0 0.0
  %1349 = vmatprep.subr.mxu0 0.0
  %1350 = vmatpush2.msra.mxu0 0.0
  %1351 = vmatprep.subr.mxu0 0.0
  %1352 = vmatpush2.msra.mxu0 0.0
  %1353 = vmatprep.subr.mxu0 0.0
  %1354 = vmatpush2.msra.mxu0 0.0
  %1355 = vmatprep.subr.mxu0 0.0
  %1356 = vmatpush2.msra.mxu0 0.0
  %1357 = vmatprep.subr.mxu0 0.0
  %1358 = vmatpush2.msra.mxu0 0.0
  %1359 = vmatprep.mubr.f32.mxu0 0.0
  %1360 = vmatmul.mubr.f32.gmra.mxu0 %v1290
  %v1361 = vpop.f32.mrf.mxu0
  %v1362 = vadd.f32 %v1288, %v1361
  %v1363 = vpop.f32.mrf.mxu0
  %1364 = vmatprep.mubr.f32.mxu0 0.0
  %1365 = vmatmul.mubr.f32.gmra.mxu0 %v1293
  %v1366 = vpop.f32.mrf.mxu0
  %v1367 = vadd.f32 %v1288, %v1366
  %v1368 = vpop.f32.mrf.mxu0
  %1369 = vdwg.mxu0
  %v1370 = vadd.f32 %v1362, %v1186
  %v1371 = vadd.f32 %v1367, %v1187
  %v1372 = vmul.f32 %v1370, %v553
  %v1373 = vmul.f32 %v1371, %v558
  %v1374 = vsel %vm182, %v1372, 0.0
  %1375 = vadd.xlane.f32.xlu0 %v1374
  %v1376 = vpop.xlane.xlu0 %1375
  %v1377 = vsel %vm182, %v1373, 0.0
  %1378 = vadd.xlane.f32.xlu0 %v1377
  %v1379 = vpop.xlane.xlu0 %1378
  %v1380 = vmul.f32 %v1376, %v570
  %v1381 = vmul.f32 %v1379, %v570
  %v1382 = vsub.f32 %v1372, %v1380
  %v1383 = vsub.f32 %v1373, %v1381
  %v1384 = vmul.f32 %v1382, %v1382
  %v1385 = vmul.f32 %v1383, %v1383
  %v1386 = vsel %vm182, %v1384, 0.0
  %1387 = vadd.xlane.f32.xlu0 %v1386
  %v1388 = vpop.xlane.xlu0 %1387
  %v1389 = vsel %vm182, %v1385, 0.0
  %1390 = vadd.xlane.f32.xlu0 %v1389
  %v1391 = vpop.xlane.xlu0 %1390
  %v1392 = vmul.f32 %v1388, %v570
  %v1393 = vmul.f32 %v1391, %v570
  %v1394 = vadd.f32 %v1392, 1e-08
  %v1395 = vadd.f32 %v1393, 1e-08
  %v1396 = vrsqrt.pop %v1394
  %v1397 = vrsqrt.pop %v1395
  %v1398 = vmul.f32 %v1382, %v1396
  %v1399 = vmul.f32 %v1383, %v1397
  %v1400 = vlaneseq
  %v1401 = vshrl.u32 %v1400, 7
  %v1402 = vsub.s32 3, %v1401
  %v1403 = vrot.slane %v26, %v1402
  %v1404 = vmul.f32 %v1398, %v1403
  %v1405 = vmul.f32 %v1399, %v1403
  %v1406 = vlaneseq
  %v1407 = vshrl.u32 %v1406, 7
  %v1408 = vsub.s32 4, %v1407
  %v1409 = vrot.slane %v26, %v1408
  %v1410 = vadd.f32 %v1404, %v1409
  %v1411 = vadd.f32 %v1405, %v1409
  %s1412 = scalar_lea.vmem %s2, 224
  %v1413 = vld [vmem:[%s1412] sm:$0xff]
  %v1414 = vld [vmem:[%s1412 + $0x8] sm:$0xff]
  %v1415 = vld [vmem:[%s1412 + $0x10] sm:$0xff]
  %v1416 = vld [vmem:[%s1412 + $0x18] sm:$0xff]
  %v1417 = vlaneseq
  %v1418 = vshrl.u32 %v1417, 7
  %v1419 = vsub.s32 5, %v1418
  %v1420 = vrot.slane %v26, %v1419
  %v1422 = vsel %vm182, %v1410, 0
  %v1425 = vsel %vm182, %v1411, 0
  %1427 = vmatprep.subr.mxu0 0.0
  %1428 = vmatpush1.msra.mxu0 0.0
  %1429 = vmatprep.subr.mxu0 0.0
  %1430 = vmatpush1.msra.mxu0 0.0
  %1431 = vmatprep.subr.mxu0 0.0
  %1432 = vmatpush1.msra.mxu0 0.0
  %1433 = vmatprep.subr.mxu0 0.0
  %1434 = vmatpush1.msra.mxu0 0.0
  %1435 = vmatprep.subr.mxu0 0.0
  %1436 = vmatpush1.msra.mxu0 0.0
  %1437 = vmatprep.subr.mxu0 0.0
  %1438 = vmatpush1.msra.mxu0 0.0
  %1439 = vmatprep.subr.mxu0 0.0
  %1440 = vmatpush1.msra.mxu0 0.0
  %1441 = vmatprep.subr.mxu0 0.0
  %1442 = vmatpush1.msra.mxu0 0.0
  %1443 = vmatprep.subr.mxu0 0.0
  %1444 = vmatpush1.msra.mxu0 0.0
  %1445 = vmatprep.subr.mxu0 0.0
  %1446 = vmatpush1.msra.mxu0 0.0
  %1447 = vmatprep.subr.mxu0 0.0
  %1448 = vmatpush1.msra.mxu0 0.0
  %1449 = vmatprep.subr.mxu0 0.0
  %1450 = vmatpush1.msra.mxu0 0.0
  %1451 = vmatprep.subr.mxu0 0.0
  %1452 = vmatpush1.msra.mxu0 %v1416
  %1453 = vmatprep.subr.mxu0 0.0
  %1454 = vmatpush1.msra.mxu0 %v1415
  %1455 = vmatprep.subr.mxu0 0.0
  %1456 = vmatpush1.msra.mxu0 %v1414
  %1457 = vmatprep.subr.mxu0 0.0
  %1458 = vmatpush1.msra.mxu0 %v1413
  %1459 = vmatprep.subr.mxu0 0.0
  %1460 = vmatpush2.msra.mxu0 0.0
  %1461 = vmatprep.subr.mxu0 0.0
  %1462 = vmatpush2.msra.mxu0 0.0
  %1463 = vmatprep.subr.mxu0 0.0
  %1464 = vmatpush2.msra.mxu0 0.0
  %1465 = vmatprep.subr.mxu0 0.0
  %1466 = vmatpush2.msra.mxu0 0.0
  %1467 = vmatprep.subr.mxu0 0.0
  %1468 = vmatpush2.msra.mxu0 0.0
  %1469 = vmatprep.subr.mxu0 0.0
  %1470 = vmatpush2.msra.mxu0 0.0
  %1471 = vmatprep.subr.mxu0 0.0
  %1472 = vmatpush2.msra.mxu0 0.0
  %1473 = vmatprep.subr.mxu0 0.0
  %1474 = vmatpush2.msra.mxu0 0.0
  %1475 = vmatprep.subr.mxu0 0.0
  %1476 = vmatpush2.msra.mxu0 0.0
  %1477 = vmatprep.subr.mxu0 0.0
  %1478 = vmatpush2.msra.mxu0 0.0
  %1479 = vmatprep.subr.mxu0 0.0
  %1480 = vmatpush2.msra.mxu0 0.0
  %1481 = vmatprep.subr.mxu0 0.0
  %1482 = vmatpush2.msra.mxu0 0.0
  %1483 = vmatprep.subr.mxu0 0.0
  %1484 = vmatpush2.msra.mxu0 0.0
  %1485 = vmatprep.subr.mxu0 0.0
  %1486 = vmatpush2.msra.mxu0 0.0
  %1487 = vmatprep.subr.mxu0 0.0
  %1488 = vmatpush2.msra.mxu0 0.0
  %1489 = vmatprep.subr.mxu0 0.0
  %1490 = vmatpush2.msra.mxu0 0.0
  %1491 = vmatprep.mubr.f32.mxu0 0.0
  %1492 = vmatmul.mubr.f32.gmra.mxu0 %v1422
  %v1493 = vpop.f32.mrf.mxu0
  %v1494 = vadd.f32 %v1420, %v1493
  %v1495 = vpop.f32.mrf.mxu0
  %1496 = vmatprep.mubr.f32.mxu0 0.0
  %1497 = vmatmul.mubr.f32.gmra.mxu0 %v1425
  %v1498 = vpop.f32.mrf.mxu0
  %v1499 = vadd.f32 %v1420, %v1498
  %v1500 = vpop.f32.mrf.mxu0
  %1501 = vdwg.mxu0
  %s1502 = scalar_lea.vmem %s2, 256
  %v1503 = vld [vmem:[%s1502] sm:$0xff]
  %v1504 = vld [vmem:[%s1502 + $0x8] sm:$0xff]
  %v1505 = vld [vmem:[%s1502 + $0x10] sm:$0xff]
  %v1506 = vld [vmem:[%s1502 + $0x18] sm:$0xff]
  %v1507 = vlaneseq
  %v1508 = vshrl.u32 %v1507, 7
  %v1509 = vsub.s32 6, %v1508
  %v1510 = vrot.slane %v26, %v1509
  %v1512 = vsel %vm182, %v1372, 0
  %v1515 = vsel %vm182, %v1373, 0
  %1517 = vmatprep.subr.mxu0 0.0
  %1518 = vmatpush1.msra.mxu0 0.0
  %1519 = vmatprep.subr.mxu0 0.0
  %1520 = vmatpush1.msra.mxu0 0.0
  %1521 = vmatprep.subr.mxu0 0.0
  %1522 = vmatpush1.msra.mxu0 0.0
  %1523 = vmatprep.subr.mxu0 0.0
  %1524 = vmatpush1.msra.mxu0 0.0
  %1525 = vmatprep.subr.mxu0 0.0
  %1526 = vmatpush1.msra.mxu0 0.0
  %1527 = vmatprep.subr.mxu0 0.0
  %1528 = vmatpush1.msra.mxu0 0.0
  %1529 = vmatprep.subr.mxu0 0.0
  %1530 = vmatpush1.msra.mxu0 0.0
  %1531 = vmatprep.subr.mxu0 0.0
  %1532 = vmatpush1.msra.mxu0 0.0
  %1533 = vmatprep.subr.mxu0 0.0
  %1534 = vmatpush1.msra.mxu0 0.0
  %1535 = vmatprep.subr.mxu0 0.0
  %1536 = vmatpush1.msra.mxu0 0.0
  %1537 = vmatprep.subr.mxu0 0.0
  %1538 = vmatpush1.msra.mxu0 0.0
  %1539 = vmatprep.subr.mxu0 0.0
  %1540 = vmatpush1.msra.mxu0 0.0
  %1541 = vmatprep.subr.mxu0 0.0
  %1542 = vmatpush1.msra.mxu0 %v1506
  %1543 = vmatprep.subr.mxu0 0.0
  %1544 = vmatpush1.msra.mxu0 %v1505
  %1545 = vmatprep.subr.mxu0 0.0
  %1546 = vmatpush1.msra.mxu0 %v1504
  %1547 = vmatprep.subr.mxu0 0.0
  %1548 = vmatpush1.msra.mxu0 %v1503
  %1549 = vmatprep.subr.mxu0 0.0
  %1550 = vmatpush2.msra.mxu0 0.0
  %1551 = vmatprep.subr.mxu0 0.0
  %1552 = vmatpush2.msra.mxu0 0.0
  %1553 = vmatprep.subr.mxu0 0.0
  %1554 = vmatpush2.msra.mxu0 0.0
  %1555 = vmatprep.subr.mxu0 0.0
  %1556 = vmatpush2.msra.mxu0 0.0
  %1557 = vmatprep.subr.mxu0 0.0
  %1558 = vmatpush2.msra.mxu0 0.0
  %1559 = vmatprep.subr.mxu0 0.0
  %1560 = vmatpush2.msra.mxu0 0.0
  %1561 = vmatprep.subr.mxu0 0.0
  %1562 = vmatpush2.msra.mxu0 0.0
  %1563 = vmatprep.subr.mxu0 0.0
  %1564 = vmatpush2.msra.mxu0 0.0
  %1565 = vmatprep.subr.mxu0 0.0
  %1566 = vmatpush2.msra.mxu0 0.0
  %1567 = vmatprep.subr.mxu0 0.0
  %1568 = vmatpush2.msra.mxu0 0.0
  %1569 = vmatprep.subr.mxu0 0.0
  %1570 = vmatpush2.msra.mxu0 0.0
  %1571 = vmatprep.subr.mxu0 0.0
  %1572 = vmatpush2.msra.mxu0 0.0
  %1573 = vmatprep.subr.mxu0 0.0
  %1574 = vmatpush2.msra.mxu0 0.0
  %1575 = vmatprep.subr.mxu0 0.0
  %1576 = vmatpush2.msra.mxu0 0.0
  %1577 = vmatprep.subr.mxu0 0.0
  %1578 = vmatpush2.msra.mxu0 0.0
  %1579 = vmatprep.subr.mxu0 0.0
  %1580 = vmatpush2.msra.mxu0 0.0
  %1581 = vmatprep.mubr.f32.mxu0 0.0
  %1582 = vmatmul.mubr.f32.gmra.mxu0 %v1512
  %v1583 = vpop.f32.mrf.mxu0
  %v1584 = vadd.f32 %v1510, %v1583
  %v1585 = vpop.f32.mrf.mxu0
  %1586 = vmatprep.mubr.f32.mxu0 0.0
  %1587 = vmatmul.mubr.f32.gmra.mxu0 %v1515
  %v1588 = vpop.f32.mrf.mxu0
  %v1589 = vadd.f32 %v1510, %v1588
  %v1590 = vpop.f32.mrf.mxu0
  %1591 = vdwg.mxu0
  %s1592 = scalar_lea.vmem %s2, 288
  %v1593 = vld [vmem:[%s1592] sm:$0xff]
  %v1594 = vld [vmem:[%s1592 + $0x8] sm:$0xff]
  %v1595 = vld [vmem:[%s1592 + $0x10] sm:$0xff]
  %v1596 = vld [vmem:[%s1592 + $0x18] sm:$0xff]
  %v1597 = vlaneseq
  %v1598 = vshrl.u32 %v1597, 7
  %v1599 = vsub.s32 7, %v1598
  %v1600 = vrot.slane %v26, %v1599
  %1601 = vmatprep.subr.mxu0 0.0
  %1602 = vmatpush1.msra.mxu0 0.0
  %1603 = vmatprep.subr.mxu0 0.0
  %1604 = vmatpush1.msra.mxu0 0.0
  %1605 = vmatprep.subr.mxu0 0.0
  %1606 = vmatpush1.msra.mxu0 0.0
  %1607 = vmatprep.subr.mxu0 0.0
  %1608 = vmatpush1.msra.mxu0 0.0
  %1609 = vmatprep.subr.mxu0 0.0
  %1610 = vmatpush1.msra.mxu0 0.0
  %1611 = vmatprep.subr.mxu0 0.0
  %1612 = vmatpush1.msra.mxu0 0.0
  %1613 = vmatprep.subr.mxu0 0.0
  %1614 = vmatpush1.msra.mxu0 0.0
  %1615 = vmatprep.subr.mxu0 0.0
  %1616 = vmatpush1.msra.mxu0 0.0
  %1617 = vmatprep.subr.mxu0 0.0
  %1618 = vmatpush1.msra.mxu0 0.0
  %1619 = vmatprep.subr.mxu0 0.0
  %1620 = vmatpush1.msra.mxu0 0.0
  %1621 = vmatprep.subr.mxu0 0.0
  %1622 = vmatpush1.msra.mxu0 0.0
  %1623 = vmatprep.subr.mxu0 0.0
  %1624 = vmatpush1.msra.mxu0 0.0
  %1625 = vmatprep.subr.mxu0 0.0
  %1626 = vmatpush1.msra.mxu0 %v1596
  %1627 = vmatprep.subr.mxu0 0.0
  %1628 = vmatpush1.msra.mxu0 %v1595
  %1629 = vmatprep.subr.mxu0 0.0
  %1630 = vmatpush1.msra.mxu0 %v1594
  %1631 = vmatprep.subr.mxu0 0.0
  %1632 = vmatpush1.msra.mxu0 %v1593
  %1633 = vmatprep.subr.mxu0 0.0
  %1634 = vmatpush2.msra.mxu0 0.0
  %1635 = vmatprep.subr.mxu0 0.0
  %1636 = vmatpush2.msra.mxu0 0.0
  %1637 = vmatprep.subr.mxu0 0.0
  %1638 = vmatpush2.msra.mxu0 0.0
  %1639 = vmatprep.subr.mxu0 0.0
  %1640 = vmatpush2.msra.mxu0 0.0
  %1641 = vmatprep.subr.mxu0 0.0
  %1642 = vmatpush2.msra.mxu0 0.0
  %1643 = vmatprep.subr.mxu0 0.0
  %1644 = vmatpush2.msra.mxu0 0.0
  %1645 = vmatprep.subr.mxu0 0.0
  %1646 = vmatpush2.msra.mxu0 0.0
  %1647 = vmatprep.subr.mxu0 0.0
  %1648 = vmatpush2.msra.mxu0 0.0
  %1649 = vmatprep.subr.mxu0 0.0
  %1650 = vmatpush2.msra.mxu0 0.0
  %1651 = vmatprep.subr.mxu0 0.0
  %1652 = vmatpush2.msra.mxu0 0.0
  %1653 = vmatprep.subr.mxu0 0.0
  %1654 = vmatpush2.msra.mxu0 0.0
  %1655 = vmatprep.subr.mxu0 0.0
  %1656 = vmatpush2.msra.mxu0 0.0
  %1657 = vmatprep.subr.mxu0 0.0
  %1658 = vmatpush2.msra.mxu0 0.0
  %1659 = vmatprep.subr.mxu0 0.0
  %1660 = vmatpush2.msra.mxu0 0.0
  %1661 = vmatprep.subr.mxu0 0.0
  %1662 = vmatpush2.msra.mxu0 0.0
  %1663 = vmatprep.subr.mxu0 0.0
  %1664 = vmatpush2.msra.mxu0 0.0
  %1665 = vmatprep.mubr.f32.mxu0 0.0
  %1666 = vmatmul.mubr.f32.gmra.mxu0 %v1512
  %v1667 = vpop.f32.mrf.mxu0
  %v1668 = vadd.f32 %v1600, %v1667
  %v1669 = vpop.f32.mrf.mxu0
  %1670 = vmatprep.mubr.f32.mxu0 0.0
  %1671 = vmatmul.mubr.f32.gmra.mxu0 %v1515
  %v1672 = vpop.f32.mrf.mxu0
  %v1673 = vadd.f32 %v1600, %v1672
  %v1674 = vpop.f32.mrf.mxu0
  %1675 = vdwg.mxu0
  %v1677 = vsel %vm182, %v1494, 0
  %v1680 = vsel %vm182, %v1499, 0
  %v1683 = vsel %vm182, %v1584, 0
  %v1686 = vsel %vm182, %v1589, 0
  %1688 = vmatprep.subr.mxu0 0.0
  %1689 = vmatpush1.xpose.msra.mxu0 0.0
  %1690 = vmatprep.subr.mxu0 0.0
  %1691 = vmatpush1.xpose.msra.mxu0 0.0
  %1692 = vmatprep.subr.mxu0 0.0
  %1693 = vmatpush1.xpose.msra.mxu0 0.0
  %1694 = vmatprep.subr.mxu0 0.0
  %1695 = vmatpush1.xpose.msra.mxu0 0.0
  %1696 = vmatprep.subr.mxu0 0.0
  %1697 = vmatpush1.xpose.msra.mxu0 0.0
  %1698 = vmatprep.subr.mxu0 0.0
  %1699 = vmatpush1.xpose.msra.mxu0 0.0
  %1700 = vmatprep.subr.mxu0 0.0
  %1701 = vmatpush1.xpose.msra.mxu0 0.0
  %1702 = vmatprep.subr.mxu0 0.0
  %1703 = vmatpush1.xpose.msra.mxu0 0.0
  %1704 = vmatprep.subr.mxu0 0.0
  %1705 = vmatpush1.xpose.msra.mxu0 0.0
  %1706 = vmatprep.subr.mxu0 0.0
  %1707 = vmatpush1.xpose.msra.mxu0 0.0
  %1708 = vmatprep.subr.mxu0 0.0
  %1709 = vmatpush1.xpose.msra.mxu0 0.0
  %1710 = vmatprep.subr.mxu0 0.0
  %1711 = vmatpush1.xpose.msra.mxu0 0.0
  %1712 = vmatprep.subr.mxu0 0.0
  %1713 = vmatpush1.xpose.msra.mxu0 0.0
  %1714 = vmatprep.subr.mxu0 0.0
  %1715 = vmatpush1.xpose.msra.mxu0 0.0
  %1716 = vmatprep.subr.mxu0 0.0
  %1717 = vmatpush1.xpose.msra.mxu0 %v1686
  %1718 = vmatprep.subr.mxu0 0.0
  %1719 = vmatpush1.xpose.msra.mxu0 %v1683
  %1720 = vmatprep.subr.mxu0 0.0
  %1721 = vmatpush2.xpose.msra.mxu0 0.0
  %1722 = vmatprep.subr.mxu0 0.0
  %1723 = vmatpush2.xpose.msra.mxu0 0.0
  %1724 = vmatprep.subr.mxu0 0.0
  %1725 = vmatpush2.xpose.msra.mxu0 0.0
  %1726 = vmatprep.subr.mxu0 0.0
  %1727 = vmatpush2.xpose.msra.mxu0 0.0
  %1728 = vmatprep.subr.mxu0 0.0
  %1729 = vmatpush2.xpose.msra.mxu0 0.0
  %1730 = vmatprep.subr.mxu0 0.0
  %1731 = vmatpush2.xpose.msra.mxu0 0.0
  %1732 = vmatprep.subr.mxu0 0.0
  %1733 = vmatpush2.xpose.msra.mxu0 0.0
  %1734 = vmatprep.subr.mxu0 0.0
  %1735 = vmatpush2.xpose.msra.mxu0 0.0
  %1736 = vmatprep.subr.mxu0 0.0
  %1737 = vmatpush2.xpose.msra.mxu0 0.0
  %1738 = vmatprep.subr.mxu0 0.0
  %1739 = vmatpush2.xpose.msra.mxu0 0.0
  %1740 = vmatprep.subr.mxu0 0.0
  %1741 = vmatpush2.xpose.msra.mxu0 0.0
  %1742 = vmatprep.subr.mxu0 0.0
  %1743 = vmatpush2.xpose.msra.mxu0 0.0
  %1744 = vmatprep.subr.mxu0 0.0
  %1745 = vmatpush2.xpose.msra.mxu0 0.0
  %1746 = vmatprep.subr.mxu0 0.0
  %1747 = vmatpush2.xpose.msra.mxu0 0.0
  %1748 = vmatprep.subr.mxu0 0.0
  %1749 = vmatpush2.xpose.msra.mxu0 0.0
  %1750 = vmatprep.subr.mxu0 0.0
  %1751 = vmatpush2.xpose.msra.mxu0 0.0
  %1752 = vmatprep.mubr.f32.mxu0 0.0
  %1753 = vmatmul.mubr.f32.gmra.mxu0 %v1677
  %v1754 = vpop.f32.mrf.mxu0
  %v1755 = vadd.f32 %v562, %v1754
  %v1756 = vpop.f32.mrf.mxu0
  %1757 = vmatprep.mubr.f32.mxu0 0.0
  %1758 = vmatmul.mubr.f32.gmra.mxu0 %v1680
  %v1759 = vpop.f32.mrf.mxu0
  %v1760 = vadd.f32 %v563, %v1759
  %v1761 = vpop.f32.mrf.mxu0
  %1762 = vdwg.mxu0
  %v1763 = vsel %vm954, %v1755, -inf
  %1764 = vmax.xlane.f32.xlu0 %v1763
  %v1765 = vpop.xlane.xlu0 %1764
  %v1766 = vsel %vm954, %v1760, -inf
  %1767 = vmax.xlane.f32.xlu0 %v1766
  %v1768 = vpop.xlane.xlu0 %1767
  %v1769 = vsub.f32 %v1755, %v1765
  %v1770 = vsub.f32 %v1760, %v1768
  %v1771 = vmul.f32 %v1769, 1.442695
  %v1772 = vpow.pop %v1771
  %v1773 = vmul.f32 %v1770, 1.442695
  %v1774 = vpow.pop %v1773
  %v1775 = vsel %vm954, %v1772, 0.0
  %1776 = vadd.xlane.f32.xlu0 %v1775
  %v1777 = vpop.xlane.xlu0 %1776
  %v1778 = vsel %vm954, %v1774, 0.0
  %1779 = vadd.xlane.f32.xlu0 %v1778
  %v1780 = vpop.xlane.xlu0 %1779
  %v1781 = vrcp.pop %v1777
  %v1782 = vrcp.pop %v1780
  %v1783 = vmul.f32 %v1772, %v1781
  %v1784 = vmul.f32 %v1774, %v1782
  %v1786 = vsel %vm954, %v1783, 0
  %v1789 = vsel %vm954, %v1784, 0
  %1791 = vmatprep.subr.mxu0 0.0
  %1792 = vmatpush1.msra.mxu0 0.0
  %1793 = vmatprep.subr.mxu0 0.0
  %1794 = vmatpush1.msra.mxu0 0.0
  %1795 = vmatprep.subr.mxu0 0.0
  %1796 = vmatpush1.msra.mxu0 0.0
  %1797 = vmatprep.subr.mxu0 0.0
  %1798 = vmatpush1.msra.mxu0 0.0
  %1799 = vmatprep.subr.mxu0 0.0
  %1800 = vmatpush1.msra.mxu0 0.0
  %1801 = vmatprep.subr.mxu0 0.0
  %1802 = vmatpush1.msra.mxu0 0.0
  %1803 = vmatprep.subr.mxu0 0.0
  %1804 = vmatpush1.msra.mxu0 0.0
  %1805 = vmatprep.subr.mxu0 0.0
  %1806 = vmatpush1.msra.mxu0 0.0
  %1807 = vmatprep.subr.mxu0 0.0
  %1808 = vmatpush1.msra.mxu0 0.0
  %1809 = vmatprep.subr.mxu0 0.0
  %1810 = vmatpush1.msra.mxu0 0.0
  %1811 = vmatprep.subr.mxu0 0.0
  %1812 = vmatpush1.msra.mxu0 0.0
  %1813 = vmatprep.subr.mxu0 0.0
  %1814 = vmatpush1.msra.mxu0 0.0
  %1815 = vmatprep.subr.mxu0 0.0
  %1816 = vmatpush1.msra.mxu0 0.0
  %1817 = vmatprep.subr.mxu0 0.0
  %1818 = vmatpush1.msra.mxu0 0.0
  %1819 = vmatprep.subr.mxu0 0.0
  %1820 = vmatpush1.msra.mxu0 %v1673
  %1821 = vmatprep.subr.mxu0 0.0
  %1822 = vmatpush1.msra.mxu0 %v1668
  %1823 = vmatprep.subr.mxu0 0.0
  %1824 = vmatpush2.msra.mxu0 0.0
  %1825 = vmatprep.subr.mxu0 0.0
  %1826 = vmatpush2.msra.mxu0 0.0
  %1827 = vmatprep.subr.mxu0 0.0
  %1828 = vmatpush2.msra.mxu0 0.0
  %1829 = vmatprep.subr.mxu0 0.0
  %1830 = vmatpush2.msra.mxu0 0.0
  %1831 = vmatprep.subr.mxu0 0.0
  %1832 = vmatpush2.msra.mxu0 0.0
  %1833 = vmatprep.subr.mxu0 0.0
  %1834 = vmatpush2.msra.mxu0 0.0
  %1835 = vmatprep.subr.mxu0 0.0
  %1836 = vmatpush2.msra.mxu0 0.0
  %1837 = vmatprep.subr.mxu0 0.0
  %1838 = vmatpush2.msra.mxu0 0.0
  %1839 = vmatprep.subr.mxu0 0.0
  %1840 = vmatpush2.msra.mxu0 0.0
  %1841 = vmatprep.subr.mxu0 0.0
  %1842 = vmatpush2.msra.mxu0 0.0
  %1843 = vmatprep.subr.mxu0 0.0
  %1844 = vmatpush2.msra.mxu0 0.0
  %1845 = vmatprep.subr.mxu0 0.0
  %1846 = vmatpush2.msra.mxu0 0.0
  %1847 = vmatprep.subr.mxu0 0.0
  %1848 = vmatpush2.msra.mxu0 0.0
  %1849 = vmatprep.subr.mxu0 0.0
  %1850 = vmatpush2.msra.mxu0 0.0
  %1851 = vmatprep.subr.mxu0 0.0
  %1852 = vmatpush2.msra.mxu0 0.0
  %1853 = vmatprep.subr.mxu0 0.0
  %1854 = vmatpush2.msra.mxu0 0.0
  %1855 = vmatprep.mubr.f32.mxu0 0.0
  %1856 = vmatmul.mubr.f32.gmra.mxu0 %v1786
  %v1857 = vpop.f32.mrf.mxu0
  %v1858 = vadd.f32 0.0, %v1857
  %v1859 = vpop.f32.mrf.mxu0
  %1860 = vmatprep.mubr.f32.mxu0 0.0
  %1861 = vmatmul.mubr.f32.gmra.mxu0 %v1789
  %v1862 = vpop.f32.mrf.mxu0
  %v1863 = vadd.f32 0.0, %v1862
  %v1864 = vpop.f32.mrf.mxu0
  %1865 = vdwg.mxu0
  %s1866 = scalar_lea.vmem %s2, 320
  %v1867 = vld [vmem:[%s1866] sm:$0xff]
  %v1868 = vld [vmem:[%s1866 + $0x8] sm:$0xff]
  %v1869 = vld [vmem:[%s1866 + $0x10] sm:$0xff]
  %v1870 = vld [vmem:[%s1866 + $0x18] sm:$0xff]
  %v1871 = vlaneseq
  %v1872 = vshrl.u32 %v1871, 7
  %v1873 = vsub.s32 0, %v1872
  %v1874 = vrot.slane %v27, %v1873
  %v1876 = vsel %vm182, %v1858, 0
  %v1879 = vsel %vm182, %v1863, 0
  %1881 = vmatprep.subr.mxu0 0.0
  %1882 = vmatpush1.msra.mxu0 0.0
  %1883 = vmatprep.subr.mxu0 0.0
  %1884 = vmatpush1.msra.mxu0 0.0
  %1885 = vmatprep.subr.mxu0 0.0
  %1886 = vmatpush1.msra.mxu0 0.0
  %1887 = vmatprep.subr.mxu0 0.0
  %1888 = vmatpush1.msra.mxu0 0.0
  %1889 = vmatprep.subr.mxu0 0.0
  %1890 = vmatpush1.msra.mxu0 0.0
  %1891 = vmatprep.subr.mxu0 0.0
  %1892 = vmatpush1.msra.mxu0 0.0
  %1893 = vmatprep.subr.mxu0 0.0
  %1894 = vmatpush1.msra.mxu0 0.0
  %1895 = vmatprep.subr.mxu0 0.0
  %1896 = vmatpush1.msra.mxu0 0.0
  %1897 = vmatprep.subr.mxu0 0.0
  %1898 = vmatpush1.msra.mxu0 0.0
  %1899 = vmatprep.subr.mxu0 0.0
  %1900 = vmatpush1.msra.mxu0 0.0
  %1901 = vmatprep.subr.mxu0 0.0
  %1902 = vmatpush1.msra.mxu0 0.0
  %1903 = vmatprep.subr.mxu0 0.0
  %1904 = vmatpush1.msra.mxu0 0.0
  %1905 = vmatprep.subr.mxu0 0.0
  %1906 = vmatpush1.msra.mxu0 %v1870
  %1907 = vmatprep.subr.mxu0 0.0
  %1908 = vmatpush1.msra.mxu0 %v1869
  %1909 = vmatprep.subr.mxu0 0.0
  %1910 = vmatpush1.msra.mxu0 %v1868
  %1911 = vmatprep.subr.mxu0 0.0
  %1912 = vmatpush1.msra.mxu0 %v1867
  %1913 = vmatprep.subr.mxu0 0.0
  %1914 = vmatpush2.msra.mxu0 0.0
  %1915 = vmatprep.subr.mxu0 0.0
  %1916 = vmatpush2.msra.mxu0 0.0
  %1917 = vmatprep.subr.mxu0 0.0
  %1918 = vmatpush2.msra.mxu0 0.0
  %1919 = vmatprep.subr.mxu0 0.0
  %1920 = vmatpush2.msra.mxu0 0.0
  %1921 = vmatprep.subr.mxu0 0.0
  %1922 = vmatpush2.msra.mxu0 0.0
  %1923 = vmatprep.subr.mxu0 0.0
  %1924 = vmatpush2.msra.mxu0 0.0
  %1925 = vmatprep.subr.mxu0 0.0
  %1926 = vmatpush2.msra.mxu0 0.0
  %1927 = vmatprep.subr.mxu0 0.0
  %1928 = vmatpush2.msra.mxu0 0.0
  %1929 = vmatprep.subr.mxu0 0.0
  %1930 = vmatpush2.msra.mxu0 0.0
  %1931 = vmatprep.subr.mxu0 0.0
  %1932 = vmatpush2.msra.mxu0 0.0
  %1933 = vmatprep.subr.mxu0 0.0
  %1934 = vmatpush2.msra.mxu0 0.0
  %1935 = vmatprep.subr.mxu0 0.0
  %1936 = vmatpush2.msra.mxu0 0.0
  %1937 = vmatprep.subr.mxu0 0.0
  %1938 = vmatpush2.msra.mxu0 0.0
  %1939 = vmatprep.subr.mxu0 0.0
  %1940 = vmatpush2.msra.mxu0 0.0
  %1941 = vmatprep.subr.mxu0 0.0
  %1942 = vmatpush2.msra.mxu0 0.0
  %1943 = vmatprep.subr.mxu0 0.0
  %1944 = vmatpush2.msra.mxu0 0.0
  %1945 = vmatprep.mubr.f32.mxu0 0.0
  %1946 = vmatmul.mubr.f32.gmra.mxu0 %v1876
  %v1947 = vpop.f32.mrf.mxu0
  %v1948 = vadd.f32 %v1874, %v1947
  %v1949 = vpop.f32.mrf.mxu0
  %1950 = vmatprep.mubr.f32.mxu0 0.0
  %1951 = vmatmul.mubr.f32.gmra.mxu0 %v1879
  %v1952 = vpop.f32.mrf.mxu0
  %v1953 = vadd.f32 %v1874, %v1952
  %v1954 = vpop.f32.mrf.mxu0
  %1955 = vdwg.mxu0
  %v1956 = vadd.f32 %v1410, %v1948
  %v1957 = vadd.f32 %v1411, %v1953
  %v1958 = vsel %vm182, %v1956, 0.0
  %1959 = vadd.xlane.f32.xlu0 %v1958
  %v1960 = vpop.xlane.xlu0 %1959
  %v1961 = vsel %vm182, %v1957, 0.0
  %1962 = vadd.xlane.f32.xlu0 %v1961
  %v1963 = vpop.xlane.xlu0 %1962
  %v1964 = vmul.f32 %v1960, %v570
  %v1965 = vmul.f32 %v1963, %v570
  %v1966 = vsub.f32 %v1956, %v1964
  %v1967 = vsub.f32 %v1957, %v1965
  %v1968 = vmul.f32 %v1966, %v1966
  %v1969 = vmul.f32 %v1967, %v1967
  %v1970 = vsel %vm182, %v1968, 0.0
  %1971 = vadd.xlane.f32.xlu0 %v1970
  %v1972 = vpop.xlane.xlu0 %1971
  %v1973 = vsel %vm182, %v1969, 0.0
  %1974 = vadd.xlane.f32.xlu0 %v1973
  %v1975 = vpop.xlane.xlu0 %1974
  %v1976 = vmul.f32 %v1972, %v570
  %v1977 = vmul.f32 %v1975, %v570
  %v1978 = vadd.f32 %v1976, 1e-08
  %v1979 = vadd.f32 %v1977, 1e-08
  %v1980 = vrsqrt.pop %v1978
  %v1981 = vrsqrt.pop %v1979
  %v1982 = vmul.f32 %v1966, %v1980
  %v1983 = vmul.f32 %v1967, %v1981
  %v1984 = vlaneseq
  %v1985 = vshrl.u32 %v1984, 7
  %v1986 = vsub.s32 1, %v1985
  %v1987 = vrot.slane %v27, %v1986
  %v1988 = vmul.f32 %v1982, %v1987
  %v1989 = vmul.f32 %v1983, %v1987
  %v1990 = vlaneseq
  %v1991 = vshrl.u32 %v1990, 7
  %v1992 = vsub.s32 2, %v1991
  %v1993 = vrot.slane %v27, %v1992
  %v1994 = vadd.f32 %v1988, %v1993
  %v1995 = vadd.f32 %v1989, %v1993
  %s1996 = scalar_lea.vmem %s2, 352
  %v1997 = vld [vmem:[%s1996] sm:$0xff]
  %v1998 = vld [vmem:[%s1996 + $0x8] sm:$0xff]
  %v1999 = vld [vmem:[%s1996 + $0x10] sm:$0xff]
  %v2000 = vld [vmem:[%s1996 + $0x18] sm:$0xff]
  %v2001 = vlaneseq
  %v2002 = vshrl.u32 %v2001, 7
  %v2003 = vsub.s32 3, %v2002
  %v2004 = vrot.slane %v27, %v2003
  %v2006 = vsel %vm182, %v1994, 0
  %v2009 = vsel %vm182, %v1995, 0
  %2011 = vmatprep.subr.mxu0 0.0
  %2012 = vmatpush1.msra.mxu0 0.0
  %2013 = vmatprep.subr.mxu0 0.0
  %2014 = vmatpush1.msra.mxu0 0.0
  %2015 = vmatprep.subr.mxu0 0.0
  %2016 = vmatpush1.msra.mxu0 0.0
  %2017 = vmatprep.subr.mxu0 0.0
  %2018 = vmatpush1.msra.mxu0 0.0
  %2019 = vmatprep.subr.mxu0 0.0
  %2020 = vmatpush1.msra.mxu0 0.0
  %2021 = vmatprep.subr.mxu0 0.0
  %2022 = vmatpush1.msra.mxu0 0.0
  %2023 = vmatprep.subr.mxu0 0.0
  %2024 = vmatpush1.msra.mxu0 0.0
  %2025 = vmatprep.subr.mxu0 0.0
  %2026 = vmatpush1.msra.mxu0 0.0
  %2027 = vmatprep.subr.mxu0 0.0
  %2028 = vmatpush1.msra.mxu0 0.0
  %2029 = vmatprep.subr.mxu0 0.0
  %2030 = vmatpush1.msra.mxu0 0.0
  %2031 = vmatprep.subr.mxu0 0.0
  %2032 = vmatpush1.msra.mxu0 0.0
  %2033 = vmatprep.subr.mxu0 0.0
  %2034 = vmatpush1.msra.mxu0 0.0
  %2035 = vmatprep.subr.mxu0 0.0
  %2036 = vmatpush1.msra.mxu0 %v2000
  %2037 = vmatprep.subr.mxu0 0.0
  %2038 = vmatpush1.msra.mxu0 %v1999
  %2039 = vmatprep.subr.mxu0 0.0
  %2040 = vmatpush1.msra.mxu0 %v1998
  %2041 = vmatprep.subr.mxu0 0.0
  %2042 = vmatpush1.msra.mxu0 %v1997
  %2043 = vmatprep.subr.mxu0 0.0
  %2044 = vmatpush2.msra.mxu0 0.0
  %2045 = vmatprep.subr.mxu0 0.0
  %2046 = vmatpush2.msra.mxu0 0.0
  %2047 = vmatprep.subr.mxu0 0.0
  %2048 = vmatpush2.msra.mxu0 0.0
  %2049 = vmatprep.subr.mxu0 0.0
  %2050 = vmatpush2.msra.mxu0 0.0
  %2051 = vmatprep.subr.mxu0 0.0
  %2052 = vmatpush2.msra.mxu0 0.0
  %2053 = vmatprep.subr.mxu0 0.0
  %2054 = vmatpush2.msra.mxu0 0.0
  %2055 = vmatprep.subr.mxu0 0.0
  %2056 = vmatpush2.msra.mxu0 0.0
  %2057 = vmatprep.subr.mxu0 0.0
  %2058 = vmatpush2.msra.mxu0 0.0
  %2059 = vmatprep.subr.mxu0 0.0
  %2060 = vmatpush2.msra.mxu0 0.0
  %2061 = vmatprep.subr.mxu0 0.0
  %2062 = vmatpush2.msra.mxu0 0.0
  %2063 = vmatprep.subr.mxu0 0.0
  %2064 = vmatpush2.msra.mxu0 0.0
  %2065 = vmatprep.subr.mxu0 0.0
  %2066 = vmatpush2.msra.mxu0 0.0
  %2067 = vmatprep.subr.mxu0 0.0
  %2068 = vmatpush2.msra.mxu0 0.0
  %2069 = vmatprep.subr.mxu0 0.0
  %2070 = vmatpush2.msra.mxu0 0.0
  %2071 = vmatprep.subr.mxu0 0.0
  %2072 = vmatpush2.msra.mxu0 0.0
  %2073 = vmatprep.subr.mxu0 0.0
  %2074 = vmatpush2.msra.mxu0 0.0
  %2075 = vmatprep.mubr.f32.mxu0 0.0
  %2076 = vmatmul.mubr.f32.gmra.mxu0 %v2006
  %v2077 = vpop.f32.mrf.mxu0
  %v2078 = vadd.f32 %v2004, %v2077
  %v2079 = vpop.f32.mrf.mxu0
  %2080 = vmatprep.mubr.f32.mxu0 0.0
  %2081 = vmatmul.mubr.f32.gmra.mxu0 %v2009
  %v2082 = vpop.f32.mrf.mxu0
  %v2083 = vadd.f32 %v2004, %v2082
  %v2084 = vpop.f32.mrf.mxu0
  %2085 = vdwg.mxu0
  %v2086 = vmax.f32 %v2078, 0.0
  %v2087 = vmax.f32 %v2083, 0.0
  %s2088 = scalar_lea.vmem %s2, 384
  %v2089 = vld [vmem:[%s2088] sm:$0xff]
  %v2090 = vld [vmem:[%s2088 + $0x8] sm:$0xff]
  %v2091 = vld [vmem:[%s2088 + $0x10] sm:$0xff]
  %v2092 = vld [vmem:[%s2088 + $0x18] sm:$0xff]
  %v2093 = vlaneseq
  %v2094 = vshrl.u32 %v2093, 7
  %v2095 = vsub.s32 4, %v2094
  %v2096 = vrot.slane %v27, %v2095
  %v2098 = vsel %vm182, %v2086, 0
  %v2101 = vsel %vm182, %v2087, 0
  %2103 = vmatprep.subr.mxu0 0.0
  %2104 = vmatpush1.msra.mxu0 0.0
  %2105 = vmatprep.subr.mxu0 0.0
  %2106 = vmatpush1.msra.mxu0 0.0
  %2107 = vmatprep.subr.mxu0 0.0
  %2108 = vmatpush1.msra.mxu0 0.0
  %2109 = vmatprep.subr.mxu0 0.0
  %2110 = vmatpush1.msra.mxu0 0.0
  %2111 = vmatprep.subr.mxu0 0.0
  %2112 = vmatpush1.msra.mxu0 0.0
  %2113 = vmatprep.subr.mxu0 0.0
  %2114 = vmatpush1.msra.mxu0 0.0
  %2115 = vmatprep.subr.mxu0 0.0
  %2116 = vmatpush1.msra.mxu0 0.0
  %2117 = vmatprep.subr.mxu0 0.0
  %2118 = vmatpush1.msra.mxu0 0.0
  %2119 = vmatprep.subr.mxu0 0.0
  %2120 = vmatpush1.msra.mxu0 0.0
  %2121 = vmatprep.subr.mxu0 0.0
  %2122 = vmatpush1.msra.mxu0 0.0
  %2123 = vmatprep.subr.mxu0 0.0
  %2124 = vmatpush1.msra.mxu0 0.0
  %2125 = vmatprep.subr.mxu0 0.0
  %2126 = vmatpush1.msra.mxu0 0.0
  %2127 = vmatprep.subr.mxu0 0.0
  %2128 = vmatpush1.msra.mxu0 %v2092
  %2129 = vmatprep.subr.mxu0 0.0
  %2130 = vmatpush1.msra.mxu0 %v2091
  %2131 = vmatprep.subr.mxu0 0.0
  %2132 = vmatpush1.msra.mxu0 %v2090
  %2133 = vmatprep.subr.mxu0 0.0
  %2134 = vmatpush1.msra.mxu0 %v2089
  %2135 = vmatprep.subr.mxu0 0.0
  %2136 = vmatpush2.msra.mxu0 0.0
  %2137 = vmatprep.subr.mxu0 0.0
  %2138 = vmatpush2.msra.mxu0 0.0
  %2139 = vmatprep.subr.mxu0 0.0
  %2140 = vmatpush2.msra.mxu0 0.0
  %2141 = vmatprep.subr.mxu0 0.0
  %2142 = vmatpush2.msra.mxu0 0.0
  %2143 = vmatprep.subr.mxu0 0.0
  %2144 = vmatpush2.msra.mxu0 0.0
  %2145 = vmatprep.subr.mxu0 0.0
  %2146 = vmatpush2.msra.mxu0 0.0
  %2147 = vmatprep.subr.mxu0 0.0
  %2148 = vmatpush2.msra.mxu0 0.0
  %2149 = vmatprep.subr.mxu0 0.0
  %2150 = vmatpush2.msra.mxu0 0.0
  %2151 = vmatprep.subr.mxu0 0.0
  %2152 = vmatpush2.msra.mxu0 0.0
  %2153 = vmatprep.subr.mxu0 0.0
  %2154 = vmatpush2.msra.mxu0 0.0
  %2155 = vmatprep.subr.mxu0 0.0
  %2156 = vmatpush2.msra.mxu0 0.0
  %2157 = vmatprep.subr.mxu0 0.0
  %2158 = vmatpush2.msra.mxu0 0.0
  %2159 = vmatprep.subr.mxu0 0.0
  %2160 = vmatpush2.msra.mxu0 0.0
  %2161 = vmatprep.subr.mxu0 0.0
  %2162 = vmatpush2.msra.mxu0 0.0
  %2163 = vmatprep.subr.mxu0 0.0
  %2164 = vmatpush2.msra.mxu0 0.0
  %2165 = vmatprep.subr.mxu0 0.0
  %2166 = vmatpush2.msra.mxu0 0.0
  %2167 = vmatprep.mubr.f32.mxu0 0.0
  %2168 = vmatmul.mubr.f32.gmra.mxu0 %v2098
  %v2169 = vpop.f32.mrf.mxu0
  %v2170 = vadd.f32 %v2096, %v2169
  %v2171 = vpop.f32.mrf.mxu0
  %2172 = vmatprep.mubr.f32.mxu0 0.0
  %2173 = vmatmul.mubr.f32.gmra.mxu0 %v2101
  %v2174 = vpop.f32.mrf.mxu0
  %v2175 = vadd.f32 %v2096, %v2174
  %v2176 = vpop.f32.mrf.mxu0
  %2177 = vdwg.mxu0
  %v2178 = vadd.f32 %v2170, %v1994
  %v2179 = vadd.f32 %v2175, %v1995
  %v2180 = vmul.f32 %v2178, %v553
  %v2181 = vmul.f32 %v2179, %v558
  %v2182 = vsel %vm182, %v2180, 0.0
  %2183 = vadd.xlane.f32.xlu0 %v2182
  %v2184 = vpop.xlane.xlu0 %2183
  %v2185 = vsel %vm182, %v2181, 0.0
  %2186 = vadd.xlane.f32.xlu0 %v2185
  %v2187 = vpop.xlane.xlu0 %2186
  %v2188 = vmul.f32 %v2184, %v570
  %v2189 = vmul.f32 %v2187, %v570
  %v2190 = vsub.f32 %v2180, %v2188
  %v2191 = vsub.f32 %v2181, %v2189
  %v2192 = vmul.f32 %v2190, %v2190
  %v2193 = vmul.f32 %v2191, %v2191
  %v2194 = vsel %vm182, %v2192, 0.0
  %2195 = vadd.xlane.f32.xlu0 %v2194
  %v2196 = vpop.xlane.xlu0 %2195
  %v2197 = vsel %vm182, %v2193, 0.0
  %2198 = vadd.xlane.f32.xlu0 %v2197
  %v2199 = vpop.xlane.xlu0 %2198
  %v2200 = vmul.f32 %v2196, %v570
  %v2201 = vmul.f32 %v2199, %v570
  %v2202 = vadd.f32 %v2200, 1e-08
  %v2203 = vadd.f32 %v2201, 1e-08
  %v2204 = vrsqrt.pop %v2202
  %v2205 = vrsqrt.pop %v2203
  %v2206 = vmul.f32 %v2190, %v2204
  %v2207 = vmul.f32 %v2191, %v2205
  %v2208 = vlaneseq
  %v2209 = vshrl.u32 %v2208, 7
  %v2210 = vsub.s32 5, %v2209
  %v2211 = vrot.slane %v27, %v2210
  %v2212 = vmul.f32 %v2206, %v2211
  %v2213 = vmul.f32 %v2207, %v2211
  %v2214 = vlaneseq
  %v2215 = vshrl.u32 %v2214, 7
  %v2216 = vsub.s32 6, %v2215
  %v2217 = vrot.slane %v27, %v2216
  %v2218 = vadd.f32 %v2212, %v2217
  %v2219 = vadd.f32 %v2213, %v2217
  %v2220 = vmul.f32 %v2218, %v443
  %v2221 = vmul.f32 %v2219, %v448
  %v2222 = vmul.f32 %v2218, %v453
  %v2223 = vmul.f32 %v2219, %v458
  %v2224 = vsel %vm182, %v2220, 0.0
  %2225 = vadd.xlane.f32.xlu0 %v2224
  %v2226 = vpop.xlane.xlu0 %2225
  %v2227 = vsel %vm182, %v2221, 0.0
  %2228 = vadd.xlane.f32.xlu0 %v2227
  %v2229 = vpop.xlane.xlu0 %2228
  %v2230 = vsel %vm182, %v2222, 0.0
  %2231 = vadd.xlane.f32.xlu0 %v2230
  %v2232 = vpop.xlane.xlu0 %2231
  %v2233 = vsel %vm182, %v2223, 0.0
  %2234 = vadd.xlane.f32.xlu0 %v2233
  %v2235 = vpop.xlane.xlu0 %2234
  %vm2236 = vcmask 7168
  %2237 = vst.msk [vmem:[%s6] sm:$0xff] %vm2236, %v2226
  %2238 = vst.msk [vmem:[%s6 + $0x8] sm:$0xff] %vm2236, %v2229
  %2239 = vst.msk [vmem:[%s6 + $0x10] sm:$0xff] %vm2236, %v2232
  %2240 = vst.msk [vmem:[%s6 + $0x18] sm:$0xff] %vm2236, %v2235
  // Predicated region
  $region26: #{sasrec_forward.1} parent=0 // pred_check
    _
  $region27: #{sasrec_forward.1} parent=0 // pred_check_branch
    %2242 = sbr.rel (0) target = $region29
  $region28: #{sasrec_forward.1} parent=0 // pred_region
    _
  $region29: #{sasrec_forward.1} parent=0 // pred_fallthru
    _
  // Predicated region
  $region30: #{sasrec_forward.1} parent=0 // pred_check
    _
  $region31: #{sasrec_forward.1} parent=0 // pred_check_branch
    %2244 = sbr.rel (0) target = $region33
  $region32: #{sasrec_forward.1} parent=0 // pred_region
    _
  $region33: #{sasrec_forward.1} parent=0 // pred_fallthru
    _

</llo_original>
